<compile_context>
chip_gen: v7x
topology: tpu7x:2x2x1
jax: 0.10.0
libtpu: 0.0.40
codegen_flags: <defaults>
</compile_context>

<pallas_src>
import functools

import jax
import jax.numpy as jnp
from jax.experimental import pallas as pl
from jax.experimental.pallas import tpu as pltpu


def _round_up(x: int, m: int) -> int:
    return (x + m - 1) // m * m


def _vmem_capacity_bytes() -> int:
    """Per-core VMEM capacity; conservative 64 MiB (v7x) if the query fails."""
    try:
        info = pltpu.get_tpu_info()
        cap = getattr(info, "vmem_capacity_bytes", None)
        if cap:
            return int(cap)
    except Exception:
        pass
    return 64 * 1024 * 1024


def _default_epilogue_dtype():
    """bf16 epilogue on chips with a bf16 VPU (v6e/v7x), f32 otherwise (v5e...)."""
    try:
        kind = jax.devices()[0].device_kind.lower()
    except Exception:
        return jnp.float32
    if "v6" in kind or "v7" in kind:
        return jnp.bfloat16
    return jnp.float32


# ----------------------------------------------------------------------------
# Fused whole-MLP kernel: activation never leaves VMEM/vregs between layers.
# ----------------------------------------------------------------------------
def _fused_mlp_kernel(x_ref, *refs, num_layers: int, compute_dtype, epilogue_dtype):
    """One M-tile of the full MLP.

    refs = (w_0, b_0, w_1, b_1, ..., w_{L-1}, b_{L-1}, o_ref).
    """
    w_refs = refs[0:2 * num_layers:2]
    b_refs = refs[1:2 * num_layers:2]
    o_ref = refs[2 * num_layers]

    act = x_ref[...].astype(compute_dtype)              # cast in-kernel (no HBM pre-pass)
    for i in range(num_layers):
        y = jnp.dot(act, w_refs[i][...],                 # MXU, f32 accumulate
                    preferred_element_type=jnp.float32)
        if i < num_layers - 1:
            y = y.astype(epilogue_dtype) + b_refs[i][...]   # bias in epilogue dtype
            y = jnp.maximum(y, 0.0)                         # ReLU
            act = y.astype(compute_dtype)                   # MXU dtype for next layer
        else:
            y = y + b_refs[i][...].astype(jnp.float32)      # final layer stays f32
            o_ref[...] = y.astype(o_ref.dtype)


# ----------------------------------------------------------------------------
# Fallback: per-layer K/N-tiled linear (weights streamed, f32 accumulator).
# Used only when a layer's weights cannot stay VMEM-resident (e.g. huge hidden
# dims on v7x's 64 MiB VMEM).
# ----------------------------------------------------------------------------
def _linear_tiled_kernel(x_ref, w_ref, b_ref, o_ref, acc_ref, *, relu):
    @pl.when(pl.program_id(2) == 0)
    def _():
        acc_ref[...] = jnp.zeros_like(acc_ref)

    acc_ref[...] += jnp.dot(x_ref[...], w_ref[...],
                            preferred_element_type=jnp.float32)

    @pl.when(pl.program_id(2) == pl.num_programs(2) - 1)
    def _():
        y = acc_ref[...] + b_ref[...]
        if relu:
            y = jnp.maximum(y, 0.0)
        o_ref[...] = y.astype(o_ref.dtype)


def _tiled_linear(x, w, b, *, relu, compute_dtype, out_dtype, vmem_limit_bytes,
                  tm=256, tn=256, tk=512):
    M, K = x.shape
    N = w.shape[1]
    tm = min(tm, _round_up(M, 8))
    tn = min(tn, _round_up(N, 128))
    tk = min(tk, _round_up(K, 128))
    Mp, Kp, Np = _round_up(M, tm), _round_up(K, tk), _round_up(N, tn)

    xp = jnp.zeros((Mp, Kp), compute_dtype).at[:M, :K].set(x.astype(compute_dtype))
    wp = jnp.zeros((Kp, Np), compute_dtype).at[:K, :N].set(w.astype(compute_dtype))
    bp = jnp.zeros((1, Np), jnp.float32).at[0, :N].set(b.reshape(-1).astype(jnp.float32))

    kernel = functools.partial(_linear_tiled_kernel, relu=relu)
    out = pl.pallas_call(
        kernel,
        out_shape=jax.ShapeDtypeStruct((Mp, Np), out_dtype),
        grid_spec=pltpu.PrefetchScalarGridSpec(
            num_scalar_prefetch=0,
            grid=(Mp // tm, Np // tn, Kp // tk),
            in_specs=[pl.BlockSpec((tm, tk), lambda i, j, k: (i, k)),
                      pl.BlockSpec((tk, tn), lambda i, j, k: (k, j)),
                      pl.BlockSpec((1, tn), lambda i, j, k: (0, j))],
            out_specs=pl.BlockSpec((tm, tn), lambda i, j, k: (i, j)),
            scratch_shapes=[pltpu.VMEM((tm, tn), jnp.float32)]),
        compiler_params=pltpu.CompilerParams(
            dimension_semantics=("parallel", "parallel", "arbitrary"),
            vmem_limit_bytes=vmem_limit_bytes),
    )(xp, wp, bp)
    return out[:M, :N]


def _mlp_layerwise_tiled(x2d, params, *, compute_dtype, out_dtype, vmem_limit_bytes):
    act = x2d
    L = len(params)
    for i, (w, b) in enumerate(params):
        last = (i == L - 1)
        act = _tiled_linear(act, w, b, relu=not last,
                            compute_dtype=compute_dtype,
                            out_dtype=(out_dtype if last else compute_dtype),
                            vmem_limit_bytes=vmem_limit_bytes)
    return act


# ----------------------------------------------------------------------------
# Wrapper
# ----------------------------------------------------------------------------
def fused_mlp(x2d, params, *, compute_dtype=jnp.bfloat16, epilogue_dtype=None,
              out_dtype=None, max_tm=1024):
    """x2d: (M, K).  params: list of (W (in,out), b (out,)).  Returns (M, N)."""
    M, K = x2d.shape
    L = len(params)
    N = params[-1][0].shape[1]
    out_dtype = x2d.dtype if out_dtype is None else out_dtype
    epilogue_dtype = _default_epilogue_dtype() if epilogue_dtype is None else epilogue_dtype

    c_bytes = jnp.dtype(compute_dtype).itemsize
    o_bytes = jnp.dtype(out_dtype).itemsize
    x_bytes = jnp.dtype(x2d.dtype).itemsize

    # --- weight prep: pad only the OUTPUT feature dims to 128 lanes -----------
    # TODO(synk): cache padded/cast weights across calls in a real model.
    w_p, b_p = [], []
    in_dim = K                                        # layer-0 contraction stays unpadded
    for li, (w, b) in enumerate(params):
        d_out = w.shape[1]
        d_out_p = _round_up(d_out, 128)
        b_dtype = jnp.float32 if li == L - 1 else epilogue_dtype
        if w.shape == (in_dim, d_out_p) and w.dtype == jnp.dtype(compute_dtype):
            wp = w
        else:
            wp = jnp.zeros((in_dim, d_out_p), compute_dtype)
            wp = wp.at[:w.shape[0], :d_out].set(w.astype(compute_dtype))
        bp = jnp.zeros((1, d_out_p), b_dtype)
        bp = bp.at[0, :d_out].set(b.reshape(-1).astype(b_dtype))
        w_p.append(wp)
        b_p.append(bp)
        in_dim = d_out_p
    N_p = w_p[-1].shape[1]

    # --- per-chip VMEM policy --------------------------------------------------
    cap = _vmem_capacity_bytes()
    budget = (3 * cap) // 4
    vmem_limit = min(int(0.9 * cap), cap - (2 << 20))

    def resident_bytes(buffers):
        r = 0
        for wp, bp in zip(w_p, b_p):
            r += buffers * wp.size * c_bytes
            r += buffers * 8 * bp.shape[1] * 4        # bias row padded to 8 sublanes
        return r

    d_max = max([K, N_p] + [wp.shape[1] for wp in w_p])

    def pick_tm(resident):
        def footprint(tm):
            f = resident
            f += 2 * tm * K * x_bytes                 # input tile (double-buffered)
            f += 2 * tm * N_p * o_bytes               # output tile (double-buffered)
            f += 3 * tm * d_max * 4                   # live f32 intermediates (headroom)
            return f
        tm = None
        # MXU-friendly 256-multiples first (also a multiple of v5e's 128).
        for cand in (1024, 768, 512, 256, 128, 64, 32, 16, 8):
            if cand <= max_tm and footprint(cand) <= budget:
                tm = cand
                break
        if tm is None:
            return None
        tm = min(tm, _round_up(M, 8))
        # Megacore split only when M is big enough to amortize the duplicated
        # weight DMA into each TensorCore's private VMEM (critical on v7x).
        if M >= 512 and (M + tm - 1) // tm < 2:
            tm = max(256, _round_up((M + 1) // 2, 256))
        return tm

    def fused_attempt(single_buffer_weights):
        resident = resident_bytes(1 if single_buffer_weights else 2)
        tm = pick_tm(resident)
        if tm is None:
            return None                               # weights can't stay resident
        grid_m = (M + tm - 1) // tm                   # ragged last block is masked

        w_kwargs = ({"pipeline_mode": pl.Buffered(1)}
                    if single_buffer_weights else {})
        in_specs = [pl.BlockSpec((tm, K), lambda i: (i, 0))]
        for li in range(L):
            in_specs.append(pl.BlockSpec(w_p[li].shape, lambda i: (0, 0), **w_kwargs))
            in_specs.append(pl.BlockSpec((1, b_p[li].shape[1]), lambda i: (0, 0)))
        out_spec = pl.BlockSpec((tm, N_p), lambda i: (i, 0))

        flops = 2 * M * sum(w.shape[0] * w.shape[1] for w in w_p)
        bytes_accessed = (M * K * x_bytes + M * N_p * o_bytes
                          + sum(w.size * c_bytes for w in w_p)
                          + sum(b.size * 4 for b in b_p))

        kernel = functools.partial(_fused_mlp_kernel, num_layers=L,
                                   compute_dtype=compute_dtype,
                                   epilogue_dtype=epilogue_dtype)
        flat_params = []
        for wp, bp in zip(w_p, b_p):
            flat_params += [wp, bp]

        return pl.pallas_call(
            kernel,
            out_shape=jax.ShapeDtypeStruct((M, N_p), out_dtype),
            grid_spec=pltpu.PrefetchScalarGridSpec(
                num_scalar_prefetch=0,
                grid=(grid_m,),
                in_specs=in_specs,
                out_specs=out_spec),
            compiler_params=pltpu.CompilerParams(
                dimension_semantics=("parallel",),
                vmem_limit_bytes=vmem_limit),
            cost_estimate=pl.CostEstimate(
                flops=flops, transcendentals=0, bytes_accessed=bytes_accessed),
        )(x2d, *flat_params)

    out_p = None
    try:
        out_p = fused_attempt(True)                   # single-buffered weights
    except Exception:
        out_p = None
    if out_p is None:
        try:
            out_p = fused_attempt(False)              # default (double) buffering
        except Exception:
            out_p = None
    if out_p is None:
        # Weights too large to stay VMEM-resident: stream them layer-by-layer.
        return _mlp_layerwise_tiled(x2d, params, compute_dtype=compute_dtype,
                                    out_dtype=out_dtype,
                                    vmem_limit_bytes=vmem_limit)
    return out_p if N_p == N else out_p[:, :N]


def init_mlp_params(key, input_dim, hidden_dim, output_dim, num_layers):
    """Deterministic init mirroring nn.Linear default (uniform +/- 1/sqrt(fan_in)).

    Weights stored as (in_features, out_features) so the kernel does x @ W.
    """
    h = [hidden_dim] * (num_layers - 1)
    dims_in = [input_dim] + h
    dims_out = h + [output_dim]
    params = []
    for n_in, n_out in zip(dims_in, dims_out):
        key, kw, kb = jax.random.split(key, 3)
        bound = 1.0 / (n_in ** 0.5)
        w = jax.random.uniform(kw, (n_in, n_out), jnp.float32, -bound, bound)
        b = jax.random.uniform(kb, (n_out,), jnp.float32, -bound, bound)
        params.append((w, b))
    return params


def mlp_forward(x, params, *, compute_dtype=jnp.bfloat16, epilogue_dtype=None):
    """x: (..., input_dim). ReLU after every layer except the last (fused kernel)."""
    lead_shape = x.shape[:-1]
    x2d = x.reshape(-1, x.shape[-1])
    out2d = fused_mlp(x2d, params, compute_dtype=compute_dtype,
                      epilogue_dtype=epilogue_dtype, out_dtype=x.dtype)
    return out2d.reshape(*lead_shape, out2d.shape[-1])


def mlp_reference(x, params, *, compute_dtype=jnp.bfloat16, epilogue_dtype=None):
    """Pure-JAX reference mirroring the kernel's bf16/f32 numerics exactly."""
    if epilogue_dtype is None:
        epilogue_dtype = _default_epilogue_dtype()
    L = len(params)
    act = x.astype(compute_dtype)
    y = None
    for i, (w, b) in enumerate(params):
        y = jnp.dot(act, w.astype(compute_dtype), preferred_element_type=jnp.float32)
        if i < L - 1:
            y = y.astype(epilogue_dtype) + b.astype(epilogue_dtype)
            y = jnp.maximum(y, 0.0)
            act = y.astype(compute_dtype)
        else:
            y = y + b.astype(jnp.float32)
    return y.astype(x.dtype)


if __name__ == "__main__":
    key = jax.random.PRNGKey(0)
    k_in, k_params = jax.random.split(key)

    # Small shapes consistent with the module: sequence of feature vectors.
    batch, seq = 2, 8
    input_dim, hidden_dim, output_dim, num_layers = 32, 32, 16, 3

    x = jax.random.normal(k_in, (batch, seq, input_dim), jnp.float32)
    params = init_mlp_params(k_params, input_dim, hidden_dim, output_dim, num_layers)

    out = mlp_forward(x, params)
    out = jax.block_until_ready(out)

    ref = mlp_reference(x, params)
    assert out.shape == (batch, seq, output_dim)
    assert jnp.allclose(out, ref, atol=2e-3, rtol=2e-3), float(jnp.max(jnp.abs(out - ref)))

    print("KERNEL_OK")
</pallas_src>

<mosaic_0001>
module attributes {stable_mosaic.version = 11 : i64} {
  func.func @_fused_mlp_kernel(%arg0: i32, %arg1: memref<16x32xf32, #tpu.memory_space<vmem>>, %arg2: memref<32x128xbf16, #tpu.memory_space<vmem>>, %arg3: memref<1x128xf32, #tpu.memory_space<vmem>>, %arg4: memref<128x128xbf16, #tpu.memory_space<vmem>>, %arg5: memref<1x128xf32, #tpu.memory_space<vmem>>, %arg6: memref<128x128xbf16, #tpu.memory_space<vmem>>, %arg7: memref<1x128xf32, #tpu.memory_space<vmem>>, %arg8: memref<16x128xf32, #tpu.memory_space<vmem>>) attributes {dimension_semantics = [#tpu.dimension_semantics<parallel>], iteration_bounds = array<i64: 1>, scalar_prefetch = 0 : i64, scratch_operands = 0 : i64, tpu.core_type = #tpu.core_type<tc>, window_params = [{transform_indices = @transform_0, window_bounds = array<i64: 16, 32>}, {pipeline_mode = #tpu.pipeline_mode<synchronous>, transform_indices = @transform_1, window_bounds = array<i64: 32, 128>}, {pipeline_mode = #tpu.pipeline_mode<synchronous>, transform_indices = @transform_2, window_bounds = array<i64: 1, 128>}, {pipeline_mode = #tpu.pipeline_mode<synchronous>, transform_indices = @transform_3, window_bounds = array<i64: 128, 128>}, {pipeline_mode = #tpu.pipeline_mode<synchronous>, transform_indices = @transform_4, window_bounds = array<i64: 1, 128>}, {pipeline_mode = #tpu.pipeline_mode<synchronous>, transform_indices = @transform_5, window_bounds = array<i64: 128, 128>}, {pipeline_mode = #tpu.pipeline_mode<synchronous>, transform_indices = @transform_6, window_bounds = array<i64: 1, 128>}, {transform_indices = @transform_7, window_bounds = array<i64: 16, 128>}]} {
    %c0 = arith.constant 0 : index
    %c0_0 = arith.constant 0 : index
    %0 = vector.load %arg1[%c0, %c0_0] : memref<16x32xf32, #tpu.memory_space<vmem>>, vector<16x32xf32>
    %1 = arith.truncf %0 : vector<16x32xf32> to vector<16x32xbf16>
    %c0_1 = arith.constant 0 : index
    %c0_2 = arith.constant 0 : index
    %2 = vector.load %arg2[%c0_1, %c0_2] : memref<32x128xbf16, #tpu.memory_space<vmem>>, vector<32x128xbf16>
    %cst = arith.constant dense<0.000000e+00> : vector<16x128xf32>
    %3 = tpu.matmul %1, %2, %cst {dimension_numbers = #tpu.dot_dimension_numbers<[1], [0], [0], [1], [0, 0, 1, 1], [], []>} : vector<16x32xbf16>, vector<32x128xbf16>, vector<16x128xf32> -> vector<16x128xf32>
    %c0_3 = arith.constant 0 : index
    %c0_4 = arith.constant 0 : index
    %4 = vector.load %arg3[%c0_3, %c0_4] : memref<1x128xf32, #tpu.memory_space<vmem>>, vector<1x128xf32>
    %5 = vector.broadcast %4 : vector<1x128xf32> to vector<16x128xf32>
    %6 = arith.addf %3, %5 : vector<16x128xf32>
    %cst_5 = arith.constant 0.000000e+00 : f32
    %7 = vector.broadcast %cst_5 : f32 to vector<16x128xf32>
    %8 = arith.maximumf %6, %7 : vector<16x128xf32>
    %9 = arith.truncf %8 : vector<16x128xf32> to vector<16x128xbf16>
    %c0_6 = arith.constant 0 : index
    %c0_7 = arith.constant 0 : index
    %10 = vector.load %arg4[%c0_6, %c0_7] : memref<128x128xbf16, #tpu.memory_space<vmem>>, vector<128x128xbf16>
    %cst_8 = arith.constant dense<0.000000e+00> : vector<16x128xf32>
    %11 = tpu.matmul %9, %10, %cst_8 {dimension_numbers = #tpu.dot_dimension_numbers<[1], [0], [0], [1], [0, 0, 1, 1], [], []>} : vector<16x128xbf16>, vector<128x128xbf16>, vector<16x128xf32> -> vector<16x128xf32>
    %c0_9 = arith.constant 0 : index
    %c0_10 = arith.constant 0 : index
    %12 = vector.load %arg5[%c0_9, %c0_10] : memref<1x128xf32, #tpu.memory_space<vmem>>, vector<1x128xf32>
    %13 = vector.broadcast %12 : vector<1x128xf32> to vector<16x128xf32>
    %14 = arith.addf %11, %13 : vector<16x128xf32>
    %cst_11 = arith.constant 0.000000e+00 : f32
    %15 = vector.broadcast %cst_11 : f32 to vector<16x128xf32>
    %16 = arith.maximumf %14, %15 : vector<16x128xf32>
    %17 = arith.truncf %16 : vector<16x128xf32> to vector<16x128xbf16>
    %c0_12 = arith.constant 0 : index
    %c0_13 = arith.constant 0 : index
    %18 = vector.load %arg6[%c0_12, %c0_13] : memref<128x128xbf16, #tpu.memory_space<vmem>>, vector<128x128xbf16>
    %cst_14 = arith.constant dense<0.000000e+00> : vector<16x128xf32>
    %19 = tpu.matmul %17, %18, %cst_14 {dimension_numbers = #tpu.dot_dimension_numbers<[1], [0], [0], [1], [0, 0, 1, 1], [], []>} : vector<16x128xbf16>, vector<128x128xbf16>, vector<16x128xf32> -> vector<16x128xf32>
    %c0_15 = arith.constant 0 : index
    %c0_16 = arith.constant 0 : index
    %20 = vector.load %arg7[%c0_15, %c0_16] : memref<1x128xf32, #tpu.memory_space<vmem>>, vector<1x128xf32>
    %21 = vector.broadcast %20 : vector<1x128xf32> to vector<16x128xf32>
    %22 = arith.addf %19, %21 : vector<16x128xf32>
    %c0_17 = arith.constant 0 : index
    %c0_18 = arith.constant 0 : index
    %23 = vector.load %arg8[%c0_17, %c0_18] : memref<16x128xf32, #tpu.memory_space<vmem>>, vector<16x128xf32>
    tpu.vector_store %arg8[%c0_17, %c0_18], %22 {strides = array<i32>} : memref<16x128xf32, #tpu.memory_space<vmem>>, vector<16x128xf32>,
    return
  }
  func.func @transform_0(%arg0: i32) -> (i32, i32) {
    %c0_i32 = arith.constant 0 : i32
    %c0_i32_0 = arith.constant 0 : i32
    return %arg0, %c0_i32 : i32, i32
  }
  func.func @transform_1(%arg0: i32) -> (i32, i32) {
    %c0_i32 = arith.constant 0 : i32
    %c0_i32_0 = arith.constant 0 : i32
    %c0_i32_1 = arith.constant 0 : i32
    return %c0_i32, %c0_i32_0 : i32, i32
  }
  func.func @transform_2(%arg0: i32) -> (i32, i32) {
    %c0_i32 = arith.constant 0 : i32
    %c0_i32_0 = arith.constant 0 : i32
    %c0_i32_1 = arith.constant 0 : i32
    return %c0_i32, %c0_i32_0 : i32, i32
  }
  func.func @transform_3(%arg0: i32) -> (i32, i32) {
    %c0_i32 = arith.constant 0 : i32
    %c0_i32_0 = arith.constant 0 : i32
    %c0_i32_1 = arith.constant 0 : i32
    return %c0_i32, %c0_i32_0 : i32, i32
  }
  func.func @transform_4(%arg0: i32) -> (i32, i32) {
    %c0_i32 = arith.constant 0 : i32
    %c0_i32_0 = arith.constant 0 : i32
    %c0_i32_1 = arith.constant 0 : i32
    return %c0_i32, %c0_i32_0 : i32, i32
  }
  func.func @transform_5(%arg0: i32) -> (i32, i32) {
    %c0_i32 = arith.constant 0 : i32
    %c0_i32_0 = arith.constant 0 : i32
    %c0_i32_1 = arith.constant 0 : i32
    return %c0_i32, %c0_i32_0 : i32, i32
  }
  func.func @transform_6(%arg0: i32) -> (i32, i32) {
    %c0_i32 = arith.constant 0 : i32
    %c0_i32_0 = arith.constant 0 : i32
    %c0_i32_1 = arith.constant 0 : i32
    return %c0_i32, %c0_i32_0 : i32, i32
  }
  func.func @transform_7(%arg0: i32) -> (i32, i32) {
    %c0_i32 = arith.constant 0 : i32
    %c0_i32_0 = arith.constant 0 : i32
    return %arg0, %c0_i32 : i32, i32
  }
}

module attributes {stable_mosaic.version = 11 : i64} {
  func.func @_fused_mlp_kernel(%arg0: i32, %arg1: memref<16x32xf32, #tpu.memory_space<vmem>>, %arg2: memref<32x128xbf16, #tpu.memory_space<vmem>>, %arg3: memref<1x128xf32, #tpu.memory_space<vmem>>, %arg4: memref<128x128xbf16, #tpu.memory_space<vmem>>, %arg5: memref<1x128xf32, #tpu.memory_space<vmem>>, %arg6: memref<128x128xbf16, #tpu.memory_space<vmem>>, %arg7: memref<1x128xf32, #tpu.memory_space<vmem>>, %arg8: memref<16x128xf32, #tpu.memory_space<vmem>>) attributes {dimension_semantics = [#tpu.dimension_semantics<parallel>], iteration_bounds = array<i64: 1>, scalar_prefetch = 0 : i64, scratch_operands = 0 : i64, tpu.core_type = #tpu.core_type<tc>, window_params = [{transform_indices = @transform_0, window_bounds = array<i64: 16, 32>}, {pipeline_mode = #tpu.pipeline_mode<synchronous>, transform_indices = @transform_1, window_bounds = array<i64: 32, 128>}, {pipeline_mode = #tpu.pipeline_mode<synchronous>, transform_indices = @transform_2, window_bounds = array<i64: 1, 128>}, {pipeline_mode = #tpu.pipeline_mode<synchronous>, transform_indices = @transform_3, window_bounds = array<i64: 128, 128>}, {pipeline_mode = #tpu.pipeline_mode<synchronous>, transform_indices = @transform_4, window_bounds = array<i64: 1, 128>}, {pipeline_mode = #tpu.pipeline_mode<synchronous>, transform_indices = @transform_5, window_bounds = array<i64: 128, 128>}, {pipeline_mode = #tpu.pipeline_mode<synchronous>, transform_indices = @transform_6, window_bounds = array<i64: 1, 128>}, {transform_indices = @transform_7, window_bounds = array<i64: 16, 128>}]} {
    %c0 = arith.constant 0 : index
    %c0_0 = arith.constant 0 : index
    %0 = vector.load %arg1[%c0, %c0_0] : memref<16x32xf32, #tpu.memory_space<vmem>>, vector<16x32xf32>
    %1 = arith.truncf %0 : vector<16x32xf32> to vector<16x32xbf16>
    %c0_1 = arith.constant 0 : index
    %c0_2 = arith.constant 0 : index
    %2 = vector.load %arg2[%c0_1, %c0_2] : memref<32x128xbf16, #tpu.memory_space<vmem>>, vector<32x128xbf16>
    %cst = arith.constant dense<0.000000e+00> : vector<16x128xf32>
    %3 = tpu.matmul %1, %2, %cst {dimension_numbers = #tpu.dot_dimension_numbers<[1], [0], [0], [1], [0, 0, 1, 1], [], []>} : vector<16x32xbf16>, vector<32x128xbf16>, vector<16x128xf32> -> vector<16x128xf32>
    %c0_3 = arith.constant 0 : index
    %c0_4 = arith.constant 0 : index
    %4 = vector.load %arg3[%c0_3, %c0_4] : memref<1x128xf32, #tpu.memory_space<vmem>>, vector<1x128xf32>
    %5 = vector.broadcast %4 : vector<1x128xf32> to vector<16x128xf32>
    %6 = arith.addf %3, %5 : vector<16x128xf32>
    %cst_5 = arith.constant 0.000000e+00 : f32
    %7 = vector.broadcast %cst_5 : f32 to vector<16x128xf32>
    %8 = arith.maximumf %6, %7 : vector<16x128xf32>
    %9 = arith.truncf %8 : vector<16x128xf32> to vector<16x128xbf16>
    %c0_6 = arith.constant 0 : index
    %c0_7 = arith.constant 0 : index
    %10 = vector.load %arg4[%c0_6, %c0_7] : memref<128x128xbf16, #tpu.memory_space<vmem>>, vector<128x128xbf16>
    %cst_8 = arith.constant dense<0.000000e+00> : vector<16x128xf32>
    %11 = tpu.matmul %9, %10, %cst_8 {dimension_numbers = #tpu.dot_dimension_numbers<[1], [0], [0], [1], [0, 0, 1, 1], [], []>} : vector<16x128xbf16>, vector<128x128xbf16>, vector<16x128xf32> -> vector<16x128xf32>
    %c0_9 = arith.constant 0 : index
    %c0_10 = arith.constant 0 : index
    %12 = vector.load %arg5[%c0_9, %c0_10] : memref<1x128xf32, #tpu.memory_space<vmem>>, vector<1x128xf32>
    %13 = vector.broadcast %12 : vector<1x128xf32> to vector<16x128xf32>
    %14 = arith.addf %11, %13 : vector<16x128xf32>
    %cst_11 = arith.constant 0.000000e+00 : f32
    %15 = vector.broadcast %cst_11 : f32 to vector<16x128xf32>
    %16 = arith.maximumf %14, %15 : vector<16x128xf32>
    %17 = arith.truncf %16 : vector<16x128xf32> to vector<16x128xbf16>
    %c0_12 = arith.constant 0 : index
    %c0_13 = arith.constant 0 : index
    %18 = vector.load %arg6[%c0_12, %c0_13] : memref<128x128xbf16, #tpu.memory_space<vmem>>, vector<128x128xbf16>
    %cst_14 = arith.constant dense<0.000000e+00> : vector<16x128xf32>
    %19 = tpu.matmul %17, %18, %cst_14 {dimension_numbers = #tpu.dot_dimension_numbers<[1], [0], [0], [1], [0, 0, 1, 1], [], []>} : vector<16x128xbf16>, vector<128x128xbf16>, vector<16x128xf32> -> vector<16x128xf32>
    %c0_15 = arith.constant 0 : index
    %c0_16 = arith.constant 0 : index
    %20 = vector.load %arg7[%c0_15, %c0_16] : memref<1x128xf32, #tpu.memory_space<vmem>>, vector<1x128xf32>
    %21 = vector.broadcast %20 : vector<1x128xf32> to vector<16x128xf32>
    %22 = arith.addf %19, %21 : vector<16x128xf32>
    %c0_17 = arith.constant 0 : index
    %c0_18 = arith.constant 0 : index
    %23 = vector.load %arg8[%c0_17, %c0_18] : memref<16x128xf32, #tpu.memory_space<vmem>>, vector<16x128xf32>
    tpu.vector_store %arg8[%c0_17, %c0_18], %22 {strides = array<i32>} : memref<16x128xf32, #tpu.memory_space<vmem>>, vector<16x128xf32>,
    return
  }
  func.func @transform_0(%arg0: i32) -> (i32, i32) {
    %c0_i32 = arith.constant 0 : i32
    %c0_i32_0 = arith.constant 0 : i32
    return %arg0, %c0_i32 : i32, i32
  }
  func.func @transform_1(%arg0: i32) -> (i32, i32) {
    %c0_i32 = arith.constant 0 : i32
    %c0_i32_0 = arith.constant 0 : i32
    %c0_i32_1 = arith.constant 0 : i32
    return %c0_i32, %c0_i32_0 : i32, i32
  }
  func.func @transform_2(%arg0: i32) -> (i32, i32) {
    %c0_i32 = arith.constant 0 : i32
    %c0_i32_0 = arith.constant 0 : i32
    %c0_i32_1 = arith.constant 0 : i32
    return %c0_i32, %c0_i32_0 : i32, i32
  }
  func.func @transform_3(%arg0: i32) -> (i32, i32) {
    %c0_i32 = arith.constant 0 : i32
    %c0_i32_0 = arith.constant 0 : i32
    %c0_i32_1 = arith.constant 0 : i32
    return %c0_i32, %c0_i32_0 : i32, i32
  }
  func.func @transform_4(%arg0: i32) -> (i32, i32) {
    %c0_i32 = arith.constant 0 : i32
    %c0_i32_0 = arith.constant 0 : i32
    %c0_i32_1 = arith.constant 0 : i32
    return %c0_i32, %c0_i32_0 : i32, i32
  }
  func.func @transform_5(%arg0: i32) -> (i32, i32) {
    %c0_i32 = arith.constant 0 : i32
    %c0_i32_0 = arith.constant 0 : i32
    %c0_i32_1 = arith.constant 0 : i32
    return %c0_i32, %c0_i32_0 : i32, i32
  }
  func.func @transform_6(%arg0: i32) -> (i32, i32) {
    %c0_i32 = arith.constant 0 : i32
    %c0_i32_0 = arith.constant 0 : i32
    %c0_i32_1 = arith.constant 0 : i32
    return %c0_i32, %c0_i32_0 : i32, i32
  }
  func.func @transform_7(%arg0: i32) -> (i32, i32) {
    %c0_i32 = arith.constant 0 : i32
    %c0_i32_0 = arith.constant 0 : i32
    return %arg0, %c0_i32 : i32, i32
  }
}

module attributes {stable_mosaic.version = 11 : i64} {
  func.func @_linear_tiled_kernel(%arg0: i32, %arg1: i32, %arg2: i32, %arg3: memref<16x128xbf16, #tpu.memory_space<vmem>>, %arg4: memref<128x128xbf16, #tpu.memory_space<vmem>>, %arg5: memref<1x128xf32, #tpu.memory_space<vmem>>, %arg6: memref<16x128xbf16, #tpu.memory_space<vmem>>, %arg7: memref<16x128xf32, #tpu.memory_space<vmem>>) attributes {dimension_semantics = [#tpu.dimension_semantics<parallel>, #tpu.dimension_semantics<parallel>, #tpu.dimension_semantics<arbitrary>], iteration_bounds = array<i64: 1, 1, 1>, scalar_prefetch = 0 : i64, scratch_operands = 1 : i64, tpu.core_type = #tpu.core_type<tc>, window_params = [{transform_indices = @transform_0, window_bounds = array<i64: 16, 128>}, {transform_indices = @transform_1, window_bounds = array<i64: 128, 128>}, {transform_indices = @transform_2, window_bounds = array<i64: 1, 128>}, {transform_indices = @transform_3, window_bounds = array<i64: 16, 128>}]} {
    %c0_i32 = arith.constant 0 : i32
    %0 = arith.cmpi eq, %arg2, %c0_i32 : i32
    %1 = arith.extui %0 : i1 to i32
    %c0_i32_0 = arith.constant 0 : i32
    %2 = arith.cmpi ne, %1, %c0_i32_0 : i32
    scf.if %2 {
      %cst_10 = arith.constant 0.000000e+00 : f32
      %12 = vector.broadcast %cst_10 : f32 to vector<16x128xf32>
      %c0_11 = arith.constant 0 : index
      %c0_12 = arith.constant 0 : index
      %13 = vector.load %arg7[%c0_11, %c0_12] : memref<16x128xf32, #tpu.memory_space<vmem>>, vector<16x128xf32>
      tpu.vector_store %arg7[%c0_11, %c0_12], %12 {strides = array<i32>} : memref<16x128xf32, #tpu.memory_space<vmem>>, vector<16x128xf32>,
    } else {
    }
    %c0 = arith.constant 0 : index
    %c0_1 = arith.constant 0 : index
    %3 = vector.load %arg7[%c0, %c0_1] : memref<16x128xf32, #tpu.memory_space<vmem>>, vector<16x128xf32>
    %c0_2 = arith.constant 0 : index
    %c0_3 = arith.constant 0 : index
    %4 = vector.load %arg3[%c0_2, %c0_3] : memref<16x128xbf16, #tpu.memory_space<vmem>>, vector<16x128xbf16>
    %c0_4 = arith.constant 0 : index
    %c0_5 = arith.constant 0 : index
    %5 = vector.load %arg4[%c0_4, %c0_5] : memref<128x128xbf16, #tpu.memory_space<vmem>>, vector<128x128xbf16>
    %cst = arith.constant dense<0.000000e+00> : vector<16x128xf32>
    %6 = tpu.matmul %4, %5, %cst {dimension_numbers = #tpu.dot_dimension_numbers<[1], [0], [0], [1], [0, 0, 1, 1], [], []>} : vector<16x128xbf16>, vector<128x128xbf16>, vector<16x128xf32> -> vector<16x128xf32>
    %7 = arith.addf %3, %6 : vector<16x128xf32>
    %c0_6 = arith.constant 0 : index
    %c0_7 = arith.constant 0 : index
    %8 = vector.load %arg7[%c0_6, %c0_7] : memref<16x128xf32, #tpu.memory_space<vmem>>, vector<16x128xf32>
    tpu.vector_store %arg7[%c0_6, %c0_7], %7 {strides = array<i32>} : memref<16x128xf32, #tpu.memory_space<vmem>>, vector<16x128xf32>,
    %c0_i32_8 = arith.constant 0 : i32
    %9 = arith.cmpi eq, %arg2, %c0_i32_8 : i32
    %10 = arith.extui %9 : i1 to i32
    %c0_i32_9 = arith.constant 0 : i32
    %11 = arith.cmpi ne, %10, %c0_i32_9 : i32
    scf.if %11 {
      %c0_10 = arith.constant 0 : index
      %c0_11 = arith.constant 0 : index
      %12 = vector.load %arg7[%c0_10, %c0_11] : memref<16x128xf32, #tpu.memory_space<vmem>>, vector<16x128xf32>
      %c0_12 = arith.constant 0 : index
      %c0_13 = arith.constant 0 : index
      %13 = vector.load %arg5[%c0_12, %c0_13] : memref<1x128xf32, #tpu.memory_space<vmem>>, vector<1x128xf32>
      %14 = vector.broadcast %13 : vector<1x128xf32> to vector<16x128xf32>
      %15 = arith.addf %12, %14 : vector<16x128xf32>
      %cst_14 = arith.constant 0.000000e+00 : f32
      %16 = vector.broadcast %cst_14 : f32 to vector<16x128xf32>
      %17 = arith.maximumf %15, %16 : vector<16x128xf32>
      %18 = arith.truncf %17 : vector<16x128xf32> to vector<16x128xbf16>
      %c0_15 = arith.constant 0 : index
      %c0_16 = arith.constant 0 : index
      %19 = vector.load %arg6[%c0_15, %c0_16] : memref<16x128xbf16, #tpu.memory_space<vmem>>, vector<16x128xbf16>
      tpu.vector_store %arg6[%c0_15, %c0_16], %18 {strides = array<i32>} : memref<16x128xbf16, #tpu.memory_space<vmem>>, vector<16x128xbf16>,
    } else {
    }
    return
  }
  func.func @transform_0(%arg0: i32, %arg1: i32, %arg2: i32) -> (i32, i32) {
    %c0_i32 = arith.constant 0 : i32
    return %arg0, %arg2 : i32, i32
  }
  func.func @transform_1(%arg0: i32, %arg1: i32, %arg2: i32) -> (i32, i32) {
    %c0_i32 = arith.constant 0 : i32
    return %arg2, %arg1 : i32, i32
  }
  func.func @transform_2(%arg0: i32, %arg1: i32, %arg2: i32) -> (i32, i32) {
    %c0_i32 = arith.constant 0 : i32
    %c0_i32_0 = arith.constant 0 : i32
    return %c0_i32, %arg1 : i32, i32
  }
  func.func @transform_3(%arg0: i32, %arg1: i32, %arg2: i32) -> (i32, i32) {
    %c0_i32 = arith.constant 0 : i32
    return %arg0, %arg1 : i32, i32
  }
}

</mosaic_0001>

<llo_original>
// kernel: tpu_custom_call.1
$region0: #{tpu_custom_call.1}
  #allocation0 [shape = 'u32[]', space=smem, size = 0x4, offset = 0x4, fixed_abs, tag = 'smem constant byte address 0x4 - core index']
  #allocation1 [shape = 'u32[144,128]{1,0:T(1,128)}', space=vmem, size = 0x12000, scoped, tag = 'internal scratch']
  %s0 = inlined_call_operand.hbm [shape: f32[16,32], index: 0, kind: input, shape index: {}]
  %s1 = inlined_call_operand.hbm [shape: bf16[32,128], index: 1, kind: input, shape index: {}]
  %s2 = inlined_call_operand.vmem [shape: f32[1,128], index: 2, kind: input, shape index: {}]
  %s3 = inlined_call_operand.hbm [shape: bf16[128,128], index: 3, kind: input, shape index: {}]
  %s4 = inlined_call_operand.vmem [shape: f32[1,128], index: 4, kind: input, shape index: {}]
  %s5 = inlined_call_operand.hbm [shape: bf16[128,128], index: 5, kind: input, shape index: {}]
  %s6 = inlined_call_operand.vmem [shape: f32[1,128], index: 6, kind: input, shape index: {}]
  %s7 = inlined_call_operand.hbm [shape: f32[16,128], index: 7, kind: output, shape index: {}]
  %s8 = sld [smem:[#allocation0]]
  $region54: #{tpu_custom_call.1} parent=0
    _
  %s10 = ssub.s32 1, %s8
  %s11 = scalar_select 0, %s10, %s8
  $region1: #{tpu_custom_call.1} parent=0
    #allocation2 [shape = 'u8[8192]{0}', space=vmem, size = 0x2000, scoped, tag = 'input window, operand 0, single buffered']
    #allocation3 [shape = 's32[1]{0}', space=sflag, size = 0x4, scoped, tag = 'scoped memory for tpu_custom_call.1']
    #allocation4 [shape = 's32[1]{0}', space=sflag, size = 0x4, scoped, tag = 'scoped memory for tpu_custom_call.1']
    #allocation5 [shape = 'u8[8192]{0}', space=vmem, size = 0x2000, scoped, tag = 'input window, operand 1, single buffered']
    #allocation6 [shape = 's32[1]{0}', space=sflag, size = 0x4, scoped, tag = 'scoped memory for tpu_custom_call.1']
    #allocation7 [shape = 'u8[32768]{0}', space=vmem, size = 0x8000, scoped, tag = 'input window, operand 3, single buffered']
    #allocation8 [shape = 'u8[32768]{0}', space=vmem, size = 0x8000, scoped, tag = 'input window, operand 5, single buffered']
    #allocation9 [shape = 's32[1]{0}', space=sflag, size = 0x4, scoped, tag = 'scoped memory for tpu_custom_call.1']
    #allocation10 [shape = 'u8[8192]{0}', space=vmem, size = 0x2000, scoped, tag = 'output window, operand 0, single buffered']
    %12 = vsyncpa [#allocation3], 0
    %13 = vsyncpa [#allocation6], 0
    %14 = vsyncpa [#allocation9], 0
    %15 = vsyncpa [#allocation4], 0
    // Predicated region
    $region2: #{tpu_custom_call.1} parent=1 // pred_check
      _
    $region3: #{tpu_custom_call.1} parent=1 // pred_check_branch
      %17 = sbr.rel (0) target = $region5
    $region4: #{tpu_custom_call.1} parent=1 // pred_region
      %s19 = ssub.s32 256, 256
      %20 = vsyncadd [#allocation3], %s19
      %s21 = sshll.u32 [#allocation2], 4
      %s22 = int_to_ptr.vmem [resolvable:$true] %s21
      %27 = dma.hbm_to_vmem [thread:$0]  %s0, 256, %s22, [#allocation3], 128, 128, 8
    $region5: #{tpu_custom_call.1} parent=1 // pred_fallthru
      _
    // Predicated region
    $region6: #{tpu_custom_call.1} parent=1 // pred_check
      _
    $region7: #{tpu_custom_call.1} parent=1 // pred_check_branch
      %29 = sbr.rel (0) target = $region9
    $region8: #{tpu_custom_call.1} parent=1 // pred_region
      %s31 = ssub.s32 256, 256
      %32 = vsyncadd [#allocation6], %s31
      %s33 = sshll.u32 [#allocation5], 4
      %s34 = int_to_ptr.vmem [resolvable:$true] %s33
      %39 = dma.hbm_to_vmem [thread:$0]  %s1, 256, %s34, [#allocation6], 64, 64, 4
    $region9: #{tpu_custom_call.1} parent=1 // pred_fallthru
      _
    // Predicated region
    $region10: #{tpu_custom_call.1} parent=1 // pred_check
      _
    $region11: #{tpu_custom_call.1} parent=1 // pred_check_branch
      %41 = sbr.rel (0) target = $region13
    $region12: #{tpu_custom_call.1} parent=1 // pred_region
      _
    $region13: #{tpu_custom_call.1} parent=1 // pred_fallthru
      _
    // Predicated region
    $region14: #{tpu_custom_call.1} parent=1 // pred_check
      _
    $region15: #{tpu_custom_call.1} parent=1 // pred_check_branch
      %43 = sbr.rel (0) target = $region17
    $region16: #{tpu_custom_call.1} parent=1 // pred_region
      %s45 = ssub.s32 1024, 1024
      %46 = vsyncadd [#allocation6], %s45
      %s47 = sshll.u32 [#allocation7], 4
      %s48 = int_to_ptr.vmem [resolvable:$true] %s47
      %53 = dma.hbm_to_vmem [thread:$0]  %s3, 1024, %s48, [#allocation6], 64, 64, 4
    $region17: #{tpu_custom_call.1} parent=1 // pred_fallthru
      _
    // Predicated region
    $region18: #{tpu_custom_call.1} parent=1 // pred_check
      _
    $region19: #{tpu_custom_call.1} parent=1 // pred_check_branch
      %55 = sbr.rel (0) target = $region21
    $region20: #{tpu_custom_call.1} parent=1 // pred_region
      _
    $region21: #{tpu_custom_call.1} parent=1 // pred_fallthru
      _
    // Predicated region
    $region22: #{tpu_custom_call.1} parent=1 // pred_check
      _
    $region23: #{tpu_custom_call.1} parent=1 // pred_check_branch
      %57 = sbr.rel (0) target = $region25
    $region24: #{tpu_custom_call.1} parent=1 // pred_region
      %s59 = ssub.s32 1024, 1024
      %60 = vsyncadd [#allocation9], %s59
      %s61 = sshll.u32 [#allocation8], 4
      %s62 = int_to_ptr.vmem [resolvable:$true] %s61
      %67 = dma.hbm_to_vmem [thread:$0]  %s5, 1024, %s62, [#allocation9], 64, 64, 4
    $region25: #{tpu_custom_call.1} parent=1 // pred_fallthru
      _
    // Predicated region
    $region26: #{tpu_custom_call.1} parent=1 // pred_check
      _
    $region27: #{tpu_custom_call.1} parent=1 // pred_check_branch
      %69 = sbr.rel (0) target = $region29
    $region28: #{tpu_custom_call.1} parent=1 // pred_region
      _
    $region29: #{tpu_custom_call.1} parent=1 // pred_fallthru
      _
    // Predicated region
    $region30: #{tpu_custom_call.1} parent=1 // pred_check
      _
    $region31: #{tpu_custom_call.1} parent=1 // pred_check_branch
      %71 = sbr.rel (0) target = $region33
    $region32: #{tpu_custom_call.1} parent=1 // pred_region
      %72 = dma.done [#allocation3], 256
    $region33: #{tpu_custom_call.1} parent=1 // pred_fallthru
      _
    // Predicated region
    $region34: #{tpu_custom_call.1} parent=1 // pred_check
      _
    $region35: #{tpu_custom_call.1} parent=1 // pred_check_branch
      %74 = sbr.rel (0) target = $region37
    $region36: #{tpu_custom_call.1} parent=1 // pred_region
      %75 = dma.done [#allocation6], 256
    $region37: #{tpu_custom_call.1} parent=1 // pred_fallthru
      _
    // Predicated region
    $region38: #{tpu_custom_call.1} parent=1 // pred_check
      _
    $region39: #{tpu_custom_call.1} parent=1 // pred_check_branch
      %77 = sbr.rel (0) target = $region41
    $region40: #{tpu_custom_call.1} parent=1 // pred_region
      %78 = dma.done [#allocation6], 1024
    $region41: #{tpu_custom_call.1} parent=1 // pred_fallthru
      _
    // Predicated region
    $region42: #{tpu_custom_call.1} parent=1 // pred_check
      _
    $region43: #{tpu_custom_call.1} parent=1 // pred_check_branch
      %80 = sbr.rel (0) target = $region45
    $region44: #{tpu_custom_call.1} parent=1 // pred_region
      %81 = dma.done [#allocation9], 1024
    $region45: #{tpu_custom_call.1} parent=1 // pred_fallthru
      _
    %v83 = vld [vmem:[#allocation2] sm:$0xff]
    %v84 = vld [vmem:[#allocation2 + $0x8] sm:$0xff]
    %v85 = vpack.c.bf16 %v84, %v83
    %v86 = vld [vmem:[#allocation5] sm:$0xf]
    %v87 = vld [vmem:[#allocation5 + $0x4] sm:$0xf]
    %v88 = vld [vmem:[#allocation5 + $0x8] sm:$0xf]
    %v89 = vld [vmem:[#allocation5 + $0xc] sm:$0xf]
    %v90 = vld [vmem:[%s2] sm:$0x1]
    %v92 = vlaneseq
    %v93 = vshrl.u32 %v92, 7
    %v94 = vsub.s32 0, %v93
    %v95 = vrot.slane %v90, %v94
    %v101 = vunpack.c.l.b16 %v86
    %v102 = vunpack.c.l.b16 %v87
    %v103 = vunpack.c.l.b16 %v88
    %v104 = vunpack.c.l.b16 %v89
    %v105 = vpack.c.b16 %v102, %v101
    %v106 = vpack.c.b16 %v104, %v103
    %vm109 = vcmask 261120
    %v111 = vsel %vm109, %v85, 0
    %113 = vmatprep.subr.bf16.mxu0 0
    %114 = vmatpush1.bf16.msra.mxu0 %v105
    %115 = vmatprep.subr.bf16.mxu0 0
    %116 = vmatpush1.bf16.msra.mxu0 %v106
    %117 = vmatprep.subr.bf16.mxu0 0
    %118 = vmatpush1.bf16.msra.mxu0 0
    %119 = vmatprep.subr.bf16.mxu0 0
    %120 = vmatpush1.bf16.msra.mxu0 0
    %121 = vmatprep.subr.bf16.mxu0 0
    %122 = vmatpush1.bf16.msra.mxu0 0
    %123 = vmatprep.subr.bf16.mxu0 0
    %124 = vmatpush1.bf16.msra.mxu0 0
    %125 = vmatprep.subr.bf16.mxu0 0
    %126 = vmatpush1.bf16.msra.mxu0 0
    %127 = vmatprep.subr.bf16.mxu0 0
    %128 = vmatpush1.bf16.msra.mxu0 0
    %129 = vmatprep.subr.bf16.mxu0 0
    %130 = vmatpush1.bf16.msra.mxu0 0
    %131 = vmatprep.subr.bf16.mxu0 0
    %132 = vmatpush1.bf16.msra.mxu0 0
    %133 = vmatprep.subr.bf16.mxu0 0
    %134 = vmatpush1.bf16.msra.mxu0 0
    %135 = vmatprep.subr.bf16.mxu0 0
    %136 = vmatpush1.bf16.msra.mxu0 0
    %137 = vmatprep.subr.bf16.mxu0 0
    %138 = vmatpush1.bf16.msra.mxu0 0
    %139 = vmatprep.subr.bf16.mxu0 0
    %140 = vmatpush1.bf16.msra.mxu0 0
    %141 = vmatprep.subr.bf16.mxu0 0
    %142 = vmatpush1.bf16.msra.mxu0 0
    %143 = vmatprep.subr.bf16.mxu0 0
    %144 = vmatpush1.bf16.msra.mxu0 0
    %145 = vmatprep.mubr.bf16.mxu0 0
    %146 = vmatmul.mubr.bf16.gmra.mrb[0].mxu0 %v111
    %v147 = vpop.f32.mrb[0].mxu0
    %v148 = vadd.f32 %v95, %v147
    %v149 = vpop.f32.mrb[0].mxu0
    %v150 = vpop.f32.mrb[0].mxu0
    %v151 = vadd.f32 %v95, %v150
    %v152 = vpop.f32.mrb[0].mxu0
    %153 = vdwg.mxu0
    %v154 = vmax.f32 %v148, 0.0
    %v155 = vmax.f32 %v151, 0.0
    %v156 = vpack.c.bf16 %v155, %v154
    %v157 = vld [vmem:[#allocation7] sm:$0xf]
    %v158 = vld [vmem:[#allocation7 + $0x4] sm:$0xf]
    %v159 = vld [vmem:[#allocation7 + $0x8] sm:$0xf]
    %v160 = vld [vmem:[#allocation7 + $0xc] sm:$0xf]
    %v161 = vld [vmem:[#allocation7 + $0x10] sm:$0xf]
    %v162 = vld [vmem:[#allocation7 + $0x14] sm:$0xf]
    %v163 = vld [vmem:[#allocation7 + $0x18] sm:$0xf]
    %v164 = vld [vmem:[#allocation7 + $0x1c] sm:$0xf]
    %v165 = vld [vmem:[#allocation7 + $0x20] sm:$0xf]
    %v166 = vld [vmem:[#allocation7 + $0x24] sm:$0xf]
    %v167 = vld [vmem:[#allocation7 + $0x28] sm:$0xf]
    %v168 = vld [vmem:[#allocation7 + $0x2c] sm:$0xf]
    %v169 = vld [vmem:[#allocation7 + $0x30] sm:$0xf]
    %v170 = vld [vmem:[#allocation7 + $0x34] sm:$0xf]
    %v171 = vld [vmem:[#allocation7 + $0x38] sm:$0xf]
    %v172 = vld [vmem:[#allocation7 + $0x3c] sm:$0xf]
    %v173 = vld [vmem:[%s4] sm:$0x1]
    %v175 = vlaneseq
    %v176 = vshrl.u32 %v175, 7
    %v177 = vsub.s32 0, %v176
    %v178 = vrot.slane %v173, %v177
    %v196 = vunpack.c.l.b16 %v157
    %v197 = vunpack.c.l.b16 %v158
    %v198 = vunpack.c.l.b16 %v159
    %v199 = vunpack.c.l.b16 %v160
    %v200 = vunpack.c.l.b16 %v161
    %v201 = vunpack.c.l.b16 %v162
    %v202 = vunpack.c.l.b16 %v163
    %v203 = vunpack.c.l.b16 %v164
    %v204 = vunpack.c.l.b16 %v165
    %v205 = vunpack.c.l.b16 %v166
    %v206 = vunpack.c.l.b16 %v167
    %v207 = vunpack.c.l.b16 %v168
    %v208 = vunpack.c.l.b16 %v169
    %v209 = vunpack.c.l.b16 %v170
    %v210 = vunpack.c.l.b16 %v171
    %v211 = vunpack.c.l.b16 %v172
    %v212 = vpack.c.b16 %v197, %v196
    %v213 = vpack.c.b16 %v199, %v198
    %v214 = vpack.c.b16 %v201, %v200
    %v215 = vpack.c.b16 %v203, %v202
    %v216 = vpack.c.b16 %v205, %v204
    %v217 = vpack.c.b16 %v207, %v206
    %v218 = vpack.c.b16 %v209, %v208
    %v219 = vpack.c.b16 %v211, %v210
    %228 = vmatprep.subr.bf16.mxu0 0
    %229 = vmatpush1.bf16.msra.mxu0 %v212
    %230 = vmatprep.subr.bf16.mxu0 0
    %231 = vmatpush1.bf16.msra.mxu0 %v213
    %232 = vmatprep.subr.bf16.mxu0 0
    %233 = vmatpush1.bf16.msra.mxu0 %v214
    %234 = vmatprep.subr.bf16.mxu0 0
    %235 = vmatpush1.bf16.msra.mxu0 %v215
    %236 = vmatprep.subr.bf16.mxu0 0
    %237 = vmatpush1.bf16.msra.mxu0 %v216
    %238 = vmatprep.subr.bf16.mxu0 0
    %239 = vmatpush1.bf16.msra.mxu0 %v217
    %240 = vmatprep.subr.bf16.mxu0 0
    %241 = vmatpush1.bf16.msra.mxu0 %v218
    %242 = vmatprep.subr.bf16.mxu0 0
    %243 = vmatpush1.bf16.msra.mxu0 %v219
    %244 = vmatprep.subr.bf16.mxu0 0
    %245 = vmatpush1.bf16.msra.mxu0 0
    %246 = vmatprep.subr.bf16.mxu0 0
    %247 = vmatpush1.bf16.msra.mxu0 0
    %248 = vmatprep.subr.bf16.mxu0 0
    %249 = vmatpush1.bf16.msra.mxu0 0
    %250 = vmatprep.subr.bf16.mxu0 0
    %251 = vmatpush1.bf16.msra.mxu0 0
    %252 = vmatprep.subr.bf16.mxu0 0
    %253 = vmatpush1.bf16.msra.mxu0 0
    %254 = vmatprep.subr.bf16.mxu0 0
    %255 = vmatpush1.bf16.msra.mxu0 0
    %256 = vmatprep.subr.bf16.mxu0 0
    %257 = vmatpush1.bf16.msra.mxu0 0
    %258 = vmatprep.subr.bf16.mxu0 0
    %259 = vmatpush1.bf16.msra.mxu0 0
    %260 = vmatprep.mubr.bf16.mxu0 0
    %261 = vmatmul.mubr.bf16.gmra.mrb[0].mxu0 %v156
    %v262 = vpop.f32.mrb[0].mxu0
    %v263 = vadd.f32 %v178, %v262
    %v264 = vpop.f32.mrb[0].mxu0
    %v265 = vpop.f32.mrb[0].mxu0
    %v266 = vadd.f32 %v178, %v265
    %v267 = vpop.f32.mrb[0].mxu0
    %268 = vdwg.mxu0
    %v269 = vmax.f32 %v263, 0.0
    %v270 = vmax.f32 %v266, 0.0
    %v271 = vpack.c.bf16 %v270, %v269
    %v272 = vld [vmem:[#allocation8] sm:$0xf]
    %v273 = vld [vmem:[#allocation8 + $0x4] sm:$0xf]
    %v274 = vld [vmem:[#allocation8 + $0x8] sm:$0xf]
    %v275 = vld [vmem:[#allocation8 + $0xc] sm:$0xf]
    %v276 = vld [vmem:[#allocation8 + $0x10] sm:$0xf]
    %v277 = vld [vmem:[#allocation8 + $0x14] sm:$0xf]
    %v278 = vld [vmem:[#allocation8 + $0x18] sm:$0xf]
    %v279 = vld [vmem:[#allocation8 + $0x1c] sm:$0xf]
    %v280 = vld [vmem:[#allocation8 + $0x20] sm:$0xf]
    %v281 = vld [vmem:[#allocation8 + $0x24] sm:$0xf]
    %v282 = vld [vmem:[#allocation8 + $0x28] sm:$0xf]
    %v283 = vld [vmem:[#allocation8 + $0x2c] sm:$0xf]
    %v284 = vld [vmem:[#allocation8 + $0x30] sm:$0xf]
    %v285 = vld [vmem:[#allocation8 + $0x34] sm:$0xf]
    %v286 = vld [vmem:[#allocation8 + $0x38] sm:$0xf]
    %v287 = vld [vmem:[#allocation8 + $0x3c] sm:$0xf]
    %v288 = vld [vmem:[%s6] sm:$0x1]
    %v290 = vlaneseq
    %v291 = vshrl.u32 %v290, 7
    %v292 = vsub.s32 0, %v291
    %v293 = vrot.slane %v288, %v292
    %v311 = vunpack.c.l.b16 %v272
    %v312 = vunpack.c.l.b16 %v273
    %v313 = vunpack.c.l.b16 %v274
    %v314 = vunpack.c.l.b16 %v275
    %v315 = vunpack.c.l.b16 %v276
    %v316 = vunpack.c.l.b16 %v277
    %v317 = vunpack.c.l.b16 %v278
    %v318 = vunpack.c.l.b16 %v279
    %v319 = vunpack.c.l.b16 %v280
    %v320 = vunpack.c.l.b16 %v281
    %v321 = vunpack.c.l.b16 %v282
    %v322 = vunpack.c.l.b16 %v283
    %v323 = vunpack.c.l.b16 %v284
    %v324 = vunpack.c.l.b16 %v285
    %v325 = vunpack.c.l.b16 %v286
    %v326 = vunpack.c.l.b16 %v287
    %v327 = vpack.c.b16 %v312, %v311
    %v328 = vpack.c.b16 %v314, %v313
    %v329 = vpack.c.b16 %v316, %v315
    %v330 = vpack.c.b16 %v318, %v317
    %v331 = vpack.c.b16 %v320, %v319
    %v332 = vpack.c.b16 %v322, %v321
    %v333 = vpack.c.b16 %v324, %v323
    %v334 = vpack.c.b16 %v326, %v325
    %343 = vmatprep.subr.bf16.mxu0 0
    %344 = vmatpush1.bf16.msra.mxu0 %v327
    %345 = vmatprep.subr.bf16.mxu0 0
    %346 = vmatpush1.bf16.msra.mxu0 %v328
    %347 = vmatprep.subr.bf16.mxu0 0
    %348 = vmatpush1.bf16.msra.mxu0 %v329
    %349 = vmatprep.subr.bf16.mxu0 0
    %350 = vmatpush1.bf16.msra.mxu0 %v330
    %351 = vmatprep.subr.bf16.mxu0 0
    %352 = vmatpush1.bf16.msra.mxu0 %v331
    %353 = vmatprep.subr.bf16.mxu0 0
    %354 = vmatpush1.bf16.msra.mxu0 %v332
    %355 = vmatprep.subr.bf16.mxu0 0
    %356 = vmatpush1.bf16.msra.mxu0 %v333
    %357 = vmatprep.subr.bf16.mxu0 0
    %358 = vmatpush1.bf16.msra.mxu0 %v334
    %359 = vmatprep.subr.bf16.mxu0 0
    %360 = vmatpush1.bf16.msra.mxu0 0
    %361 = vmatprep.subr.bf16.mxu0 0
    %362 = vmatpush1.bf16.msra.mxu0 0
    %363 = vmatprep.subr.bf16.mxu0 0
    %364 = vmatpush1.bf16.msra.mxu0 0
    %365 = vmatprep.subr.bf16.mxu0 0
    %366 = vmatpush1.bf16.msra.mxu0 0
    %367 = vmatprep.subr.bf16.mxu0 0
    %368 = vmatpush1.bf16.msra.mxu0 0
    %369 = vmatprep.subr.bf16.mxu0 0
    %370 = vmatpush1.bf16.msra.mxu0 0
    %371 = vmatprep.subr.bf16.mxu0 0
    %372 = vmatpush1.bf16.msra.mxu0 0
    %373 = vmatprep.subr.bf16.mxu0 0
    %374 = vmatpush1.bf16.msra.mxu0 0
    %375 = vmatprep.mubr.bf16.mxu0 0
    %376 = vmatmul.mubr.bf16.gmra.mrb[0].mxu0 %v271
    %v377 = vpop.f32.mrb[0].mxu0
    %v378 = vadd.f32 %v293, %v377
    %v379 = vpop.f32.mrb[0].mxu0
    %v380 = vpop.f32.mrb[0].mxu0
    %v381 = vadd.f32 %v293, %v380
    %v382 = vpop.f32.mrb[0].mxu0
    %383 = vdwg.mxu0
    %384 = vst [vmem:[#allocation10] sm:$0xff] %v378
    %385 = vst [vmem:[#allocation10 + $0x8] sm:$0xff] %v381
    // Predicated region
    $region46: #{tpu_custom_call.1} parent=1 // pred_check
      _
    $region47: #{tpu_custom_call.1} parent=1 // pred_check_branch
      %387 = sbr.rel (0) target = $region49
    $region48: #{tpu_custom_call.1} parent=1 // pred_region
      %s389 = ssub.s32 256, 256
      %390 = vsyncadd [#allocation4], %s389
      %s391 = sshll.u32 [#allocation10], 4
      %s392 = int_to_ptr.vmem [resolvable:$true] %s391
      %397 = dma.vmem_to_hbm [thread:$0]  %s392, 256, %s7, [#allocation4], 128, 128, 8
    $region49: #{tpu_custom_call.1} parent=1 // pred_fallthru
      _
    // Predicated region
    $region50: #{tpu_custom_call.1} parent=1 // pred_check
      _
    $region51: #{tpu_custom_call.1} parent=1 // pred_check_branch
      %399 = sbr.rel (0) target = $region53
    $region52: #{tpu_custom_call.1} parent=1 // pred_region
      %400 = dma.done [#allocation4], 256
    $region53: #{tpu_custom_call.1} parent=1 // pred_fallthru
      _
    %401 = vsyncpa [#allocation3], 1
    %402 = vsyncpa [#allocation6], 1
    %403 = vsyncpa [#allocation9], 1
    %404 = vsyncpa [#allocation4], 1

// kernel: tpu_custom_call.1
$region0: #{tpu_custom_call.1}
  #allocation0 [shape = 'u32[]', space=smem, size = 0x4, offset = 0x4, fixed_abs, tag = 'smem constant byte address 0x4 - core index']
  #allocation1 [shape = 'u32[144,128]{1,0:T(1,128)}', space=vmem, size = 0x12000, scoped, tag = 'internal scratch']
  %s0 = inlined_call_operand.hbm [shape: f32[16,32], index: 0, kind: input, shape index: {}]
  %s1 = inlined_call_operand.hbm [shape: bf16[32,128], index: 1, kind: input, shape index: {}]
  %s2 = inlined_call_operand.vmem [shape: f32[1,128], index: 2, kind: input, shape index: {}]
  %s3 = inlined_call_operand.hbm [shape: bf16[128,128], index: 3, kind: input, shape index: {}]
  %s4 = inlined_call_operand.vmem [shape: f32[1,128], index: 4, kind: input, shape index: {}]
  %s5 = inlined_call_operand.hbm [shape: bf16[128,128], index: 5, kind: input, shape index: {}]
  %s6 = inlined_call_operand.vmem [shape: f32[1,128], index: 6, kind: input, shape index: {}]
  %s7 = inlined_call_operand.hbm [shape: f32[16,128], index: 7, kind: output, shape index: {}]
  %s8 = sld [smem:[#allocation0]]
  $region54: #{tpu_custom_call.1} parent=0
    _
  %s10 = ssub.s32 1, %s8
  %s11 = scalar_select 0, %s10, %s8
  $region1: #{tpu_custom_call.1} parent=0
    #allocation2 [shape = 'u8[8192]{0}', space=vmem, size = 0x2000, scoped, tag = 'input window, operand 0, single buffered']
    #allocation3 [shape = 's32[1]{0}', space=sflag, size = 0x4, scoped, tag = 'scoped memory for tpu_custom_call.1']
    #allocation4 [shape = 's32[1]{0}', space=sflag, size = 0x4, scoped, tag = 'scoped memory for tpu_custom_call.1']
    #allocation5 [shape = 'u8[8192]{0}', space=vmem, size = 0x2000, scoped, tag = 'input window, operand 1, single buffered']
    #allocation6 [shape = 's32[1]{0}', space=sflag, size = 0x4, scoped, tag = 'scoped memory for tpu_custom_call.1']
    #allocation7 [shape = 'u8[32768]{0}', space=vmem, size = 0x8000, scoped, tag = 'input window, operand 3, single buffered']
    #allocation8 [shape = 'u8[32768]{0}', space=vmem, size = 0x8000, scoped, tag = 'input window, operand 5, single buffered']
    #allocation9 [shape = 's32[1]{0}', space=sflag, size = 0x4, scoped, tag = 'scoped memory for tpu_custom_call.1']
    #allocation10 [shape = 'u8[8192]{0}', space=vmem, size = 0x2000, scoped, tag = 'output window, operand 0, single buffered']
    %12 = vsyncpa [#allocation3], 0
    %13 = vsyncpa [#allocation6], 0
    %14 = vsyncpa [#allocation9], 0
    %15 = vsyncpa [#allocation4], 0
    // Predicated region
    $region2: #{tpu_custom_call.1} parent=1 // pred_check
      _
    $region3: #{tpu_custom_call.1} parent=1 // pred_check_branch
      %17 = sbr.rel (0) target = $region5
    $region4: #{tpu_custom_call.1} parent=1 // pred_region
      %s19 = ssub.s32 256, 256
      %20 = vsyncadd [#allocation3], %s19
      %s21 = sshll.u32 [#allocation2], 4
      %s22 = int_to_ptr.vmem [resolvable:$true] %s21
      %27 = dma.hbm_to_vmem [thread:$0]  %s0, 256, %s22, [#allocation3], 128, 128, 8
    $region5: #{tpu_custom_call.1} parent=1 // pred_fallthru
      _
    // Predicated region
    $region6: #{tpu_custom_call.1} parent=1 // pred_check
      _
    $region7: #{tpu_custom_call.1} parent=1 // pred_check_branch
      %29 = sbr.rel (0) target = $region9
    $region8: #{tpu_custom_call.1} parent=1 // pred_region
      %s31 = ssub.s32 256, 256
      %32 = vsyncadd [#allocation6], %s31
      %s33 = sshll.u32 [#allocation5], 4
      %s34 = int_to_ptr.vmem [resolvable:$true] %s33
      %39 = dma.hbm_to_vmem [thread:$0]  %s1, 256, %s34, [#allocation6], 64, 64, 4
    $region9: #{tpu_custom_call.1} parent=1 // pred_fallthru
      _
    // Predicated region
    $region10: #{tpu_custom_call.1} parent=1 // pred_check
      _
    $region11: #{tpu_custom_call.1} parent=1 // pred_check_branch
      %41 = sbr.rel (0) target = $region13
    $region12: #{tpu_custom_call.1} parent=1 // pred_region
      _
    $region13: #{tpu_custom_call.1} parent=1 // pred_fallthru
      _
    // Predicated region
    $region14: #{tpu_custom_call.1} parent=1 // pred_check
      _
    $region15: #{tpu_custom_call.1} parent=1 // pred_check_branch
      %43 = sbr.rel (0) target = $region17
    $region16: #{tpu_custom_call.1} parent=1 // pred_region
      %s45 = ssub.s32 1024, 1024
      %46 = vsyncadd [#allocation6], %s45
      %s47 = sshll.u32 [#allocation7], 4
      %s48 = int_to_ptr.vmem [resolvable:$true] %s47
      %53 = dma.hbm_to_vmem [thread:$0]  %s3, 1024, %s48, [#allocation6], 64, 64, 4
    $region17: #{tpu_custom_call.1} parent=1 // pred_fallthru
      _
    // Predicated region
    $region18: #{tpu_custom_call.1} parent=1 // pred_check
      _
    $region19: #{tpu_custom_call.1} parent=1 // pred_check_branch
      %55 = sbr.rel (0) target = $region21
    $region20: #{tpu_custom_call.1} parent=1 // pred_region
      _
    $region21: #{tpu_custom_call.1} parent=1 // pred_fallthru
      _
    // Predicated region
    $region22: #{tpu_custom_call.1} parent=1 // pred_check
      _
    $region23: #{tpu_custom_call.1} parent=1 // pred_check_branch
      %57 = sbr.rel (0) target = $region25
    $region24: #{tpu_custom_call.1} parent=1 // pred_region
      %s59 = ssub.s32 1024, 1024
      %60 = vsyncadd [#allocation9], %s59
      %s61 = sshll.u32 [#allocation8], 4
      %s62 = int_to_ptr.vmem [resolvable:$true] %s61
      %67 = dma.hbm_to_vmem [thread:$0]  %s5, 1024, %s62, [#allocation9], 64, 64, 4
    $region25: #{tpu_custom_call.1} parent=1 // pred_fallthru
      _
    // Predicated region
    $region26: #{tpu_custom_call.1} parent=1 // pred_check
      _
    $region27: #{tpu_custom_call.1} parent=1 // pred_check_branch
      %69 = sbr.rel (0) target = $region29
    $region28: #{tpu_custom_call.1} parent=1 // pred_region
      _
    $region29: #{tpu_custom_call.1} parent=1 // pred_fallthru
      _
    // Predicated region
    $region30: #{tpu_custom_call.1} parent=1 // pred_check
      _
    $region31: #{tpu_custom_call.1} parent=1 // pred_check_branch
      %71 = sbr.rel (0) target = $region33
    $region32: #{tpu_custom_call.1} parent=1 // pred_region
      %72 = dma.done [#allocation3], 256
    $region33: #{tpu_custom_call.1} parent=1 // pred_fallthru
      _
    // Predicated region
    $region34: #{tpu_custom_call.1} parent=1 // pred_check
      _
    $region35: #{tpu_custom_call.1} parent=1 // pred_check_branch
      %74 = sbr.rel (0) target = $region37
    $region36: #{tpu_custom_call.1} parent=1 // pred_region
      %75 = dma.done [#allocation6], 256
    $region37: #{tpu_custom_call.1} parent=1 // pred_fallthru
      _
    // Predicated region
    $region38: #{tpu_custom_call.1} parent=1 // pred_check
      _
    $region39: #{tpu_custom_call.1} parent=1 // pred_check_branch
      %77 = sbr.rel (0) target = $region41
    $region40: #{tpu_custom_call.1} parent=1 // pred_region
      %78 = dma.done [#allocation6], 1024
    $region41: #{tpu_custom_call.1} parent=1 // pred_fallthru
      _
    // Predicated region
    $region42: #{tpu_custom_call.1} parent=1 // pred_check
      _
    $region43: #{tpu_custom_call.1} parent=1 // pred_check_branch
      %80 = sbr.rel (0) target = $region45
    $region44: #{tpu_custom_call.1} parent=1 // pred_region
      %81 = dma.done [#allocation9], 1024
    $region45: #{tpu_custom_call.1} parent=1 // pred_fallthru
      _
    %v83 = vld [vmem:[#allocation2] sm:$0xff]
    %v84 = vld [vmem:[#allocation2 + $0x8] sm:$0xff]
    %v85 = vpack.c.bf16 %v84, %v83
    %v86 = vld [vmem:[#allocation5] sm:$0xf]
    %v87 = vld [vmem:[#allocation5 + $0x4] sm:$0xf]
    %v88 = vld [vmem:[#allocation5 + $0x8] sm:$0xf]
    %v89 = vld [vmem:[#allocation5 + $0xc] sm:$0xf]
    %v90 = vld [vmem:[%s2] sm:$0x1]
    %v92 = vlaneseq
    %v93 = vshrl.u32 %v92, 7
    %v94 = vsub.s32 0, %v93
    %v95 = vrot.slane %v90, %v94
    %v101 = vunpack.c.l.b16 %v86
    %v102 = vunpack.c.l.b16 %v87
    %v103 = vunpack.c.l.b16 %v88
    %v104 = vunpack.c.l.b16 %v89
    %v105 = vpack.c.b16 %v102, %v101
    %v106 = vpack.c.b16 %v104, %v103
    %vm109 = vcmask 261120
    %v111 = vsel %vm109, %v85, 0
    %113 = vmatprep.subr.bf16.mxu0 0
    %114 = vmatpush1.bf16.msra.mxu0 %v105
    %115 = vmatprep.subr.bf16.mxu0 0
    %116 = vmatpush1.bf16.msra.mxu0 %v106
    %117 = vmatprep.subr.bf16.mxu0 0
    %118 = vmatpush1.bf16.msra.mxu0 0
    %119 = vmatprep.subr.bf16.mxu0 0
    %120 = vmatpush1.bf16.msra.mxu0 0
    %121 = vmatprep.subr.bf16.mxu0 0
    %122 = vmatpush1.bf16.msra.mxu0 0
    %123 = vmatprep.subr.bf16.mxu0 0
    %124 = vmatpush1.bf16.msra.mxu0 0
    %125 = vmatprep.subr.bf16.mxu0 0
    %126 = vmatpush1.bf16.msra.mxu0 0
    %127 = vmatprep.subr.bf16.mxu0 0
    %128 = vmatpush1.bf16.msra.mxu0 0
    %129 = vmatprep.subr.bf16.mxu0 0
    %130 = vmatpush1.bf16.msra.mxu0 0
    %131 = vmatprep.subr.bf16.mxu0 0
    %132 = vmatpush1.bf16.msra.mxu0 0
    %133 = vmatprep.subr.bf16.mxu0 0
    %134 = vmatpush1.bf16.msra.mxu0 0
    %135 = vmatprep.subr.bf16.mxu0 0
    %136 = vmatpush1.bf16.msra.mxu0 0
    %137 = vmatprep.subr.bf16.mxu0 0
    %138 = vmatpush1.bf16.msra.mxu0 0
    %139 = vmatprep.subr.bf16.mxu0 0
    %140 = vmatpush1.bf16.msra.mxu0 0
    %141 = vmatprep.subr.bf16.mxu0 0
    %142 = vmatpush1.bf16.msra.mxu0 0
    %143 = vmatprep.subr.bf16.mxu0 0
    %144 = vmatpush1.bf16.msra.mxu0 0
    %145 = vmatprep.mubr.bf16.mxu0 0
    %146 = vmatmul.mubr.bf16.gmra.mrb[0].mxu0 %v111
    %v147 = vpop.f32.mrb[0].mxu0
    %v148 = vadd.f32 %v95, %v147
    %v149 = vpop.f32.mrb[0].mxu0
    %v150 = vpop.f32.mrb[0].mxu0
    %v151 = vadd.f32 %v95, %v150
    %v152 = vpop.f32.mrb[0].mxu0
    %153 = vdwg.mxu0
    %v154 = vmax.f32 %v148, 0.0
    %v155 = vmax.f32 %v151, 0.0
    %v156 = vpack.c.bf16 %v155, %v154
    %v157 = vld [vmem:[#allocation7] sm:$0xf]
    %v158 = vld [vmem:[#allocation7 + $0x4] sm:$0xf]
    %v159 = vld [vmem:[#allocation7 + $0x8] sm:$0xf]
    %v160 = vld [vmem:[#allocation7 + $0xc] sm:$0xf]
    %v161 = vld [vmem:[#allocation7 + $0x10] sm:$0xf]
    %v162 = vld [vmem:[#allocation7 + $0x14] sm:$0xf]
    %v163 = vld [vmem:[#allocation7 + $0x18] sm:$0xf]
    %v164 = vld [vmem:[#allocation7 + $0x1c] sm:$0xf]
    %v165 = vld [vmem:[#allocation7 + $0x20] sm:$0xf]
    %v166 = vld [vmem:[#allocation7 + $0x24] sm:$0xf]
    %v167 = vld [vmem:[#allocation7 + $0x28] sm:$0xf]
    %v168 = vld [vmem:[#allocation7 + $0x2c] sm:$0xf]
    %v169 = vld [vmem:[#allocation7 + $0x30] sm:$0xf]
    %v170 = vld [vmem:[#allocation7 + $0x34] sm:$0xf]
    %v171 = vld [vmem:[#allocation7 + $0x38] sm:$0xf]
    %v172 = vld [vmem:[#allocation7 + $0x3c] sm:$0xf]
    %v173 = vld [vmem:[%s4] sm:$0x1]
    %v175 = vlaneseq
    %v176 = vshrl.u32 %v175, 7
    %v177 = vsub.s32 0, %v176
    %v178 = vrot.slane %v173, %v177
    %v196 = vunpack.c.l.b16 %v157
    %v197 = vunpack.c.l.b16 %v158
    %v198 = vunpack.c.l.b16 %v159
    %v199 = vunpack.c.l.b16 %v160
    %v200 = vunpack.c.l.b16 %v161
    %v201 = vunpack.c.l.b16 %v162
    %v202 = vunpack.c.l.b16 %v163
    %v203 = vunpack.c.l.b16 %v164
    %v204 = vunpack.c.l.b16 %v165
    %v205 = vunpack.c.l.b16 %v166
    %v206 = vunpack.c.l.b16 %v167
    %v207 = vunpack.c.l.b16 %v168
    %v208 = vunpack.c.l.b16 %v169
    %v209 = vunpack.c.l.b16 %v170
    %v210 = vunpack.c.l.b16 %v171
    %v211 = vunpack.c.l.b16 %v172
    %v212 = vpack.c.b16 %v197, %v196
    %v213 = vpack.c.b16 %v199, %v198
    %v214 = vpack.c.b16 %v201, %v200
    %v215 = vpack.c.b16 %v203, %v202
    %v216 = vpack.c.b16 %v205, %v204
    %v217 = vpack.c.b16 %v207, %v206
    %v218 = vpack.c.b16 %v209, %v208
    %v219 = vpack.c.b16 %v211, %v210
    %228 = vmatprep.subr.bf16.mxu0 0
    %229 = vmatpush1.bf16.msra.mxu0 %v212
    %230 = vmatprep.subr.bf16.mxu0 0
    %231 = vmatpush1.bf16.msra.mxu0 %v213
    %232 = vmatprep.subr.bf16.mxu0 0
    %233 = vmatpush1.bf16.msra.mxu0 %v214
    %234 = vmatprep.subr.bf16.mxu0 0
    %235 = vmatpush1.bf16.msra.mxu0 %v215
    %236 = vmatprep.subr.bf16.mxu0 0
    %237 = vmatpush1.bf16.msra.mxu0 %v216
    %238 = vmatprep.subr.bf16.mxu0 0
    %239 = vmatpush1.bf16.msra.mxu0 %v217
    %240 = vmatprep.subr.bf16.mxu0 0
    %241 = vmatpush1.bf16.msra.mxu0 %v218
    %242 = vmatprep.subr.bf16.mxu0 0
    %243 = vmatpush1.bf16.msra.mxu0 %v219
    %244 = vmatprep.subr.bf16.mxu0 0
    %245 = vmatpush1.bf16.msra.mxu0 0
    %246 = vmatprep.subr.bf16.mxu0 0
    %247 = vmatpush1.bf16.msra.mxu0 0
    %248 = vmatprep.subr.bf16.mxu0 0
    %249 = vmatpush1.bf16.msra.mxu0 0
    %250 = vmatprep.subr.bf16.mxu0 0
    %251 = vmatpush1.bf16.msra.mxu0 0
    %252 = vmatprep.subr.bf16.mxu0 0
    %253 = vmatpush1.bf16.msra.mxu0 0
    %254 = vmatprep.subr.bf16.mxu0 0
    %255 = vmatpush1.bf16.msra.mxu0 0
    %256 = vmatprep.subr.bf16.mxu0 0
    %257 = vmatpush1.bf16.msra.mxu0 0
    %258 = vmatprep.subr.bf16.mxu0 0
    %259 = vmatpush1.bf16.msra.mxu0 0
    %260 = vmatprep.mubr.bf16.mxu0 0
    %261 = vmatmul.mubr.bf16.gmra.mrb[0].mxu0 %v156
    %v262 = vpop.f32.mrb[0].mxu0
    %v263 = vadd.f32 %v178, %v262
    %v264 = vpop.f32.mrb[0].mxu0
    %v265 = vpop.f32.mrb[0].mxu0
    %v266 = vadd.f32 %v178, %v265
    %v267 = vpop.f32.mrb[0].mxu0
    %268 = vdwg.mxu0
    %v269 = vmax.f32 %v263, 0.0
    %v270 = vmax.f32 %v266, 0.0
    %v271 = vpack.c.bf16 %v270, %v269
    %v272 = vld [vmem:[#allocation8] sm:$0xf]
    %v273 = vld [vmem:[#allocation8 + $0x4] sm:$0xf]
    %v274 = vld [vmem:[#allocation8 + $0x8] sm:$0xf]
    %v275 = vld [vmem:[#allocation8 + $0xc] sm:$0xf]
    %v276 = vld [vmem:[#allocation8 + $0x10] sm:$0xf]
    %v277 = vld [vmem:[#allocation8 + $0x14] sm:$0xf]
    %v278 = vld [vmem:[#allocation8 + $0x18] sm:$0xf]
    %v279 = vld [vmem:[#allocation8 + $0x1c] sm:$0xf]
    %v280 = vld [vmem:[#allocation8 + $0x20] sm:$0xf]
    %v281 = vld [vmem:[#allocation8 + $0x24] sm:$0xf]
    %v282 = vld [vmem:[#allocation8 + $0x28] sm:$0xf]
    %v283 = vld [vmem:[#allocation8 + $0x2c] sm:$0xf]
    %v284 = vld [vmem:[#allocation8 + $0x30] sm:$0xf]
    %v285 = vld [vmem:[#allocation8 + $0x34] sm:$0xf]
    %v286 = vld [vmem:[#allocation8 + $0x38] sm:$0xf]
    %v287 = vld [vmem:[#allocation8 + $0x3c] sm:$0xf]
    %v288 = vld [vmem:[%s6] sm:$0x1]
    %v290 = vlaneseq
    %v291 = vshrl.u32 %v290, 7
    %v292 = vsub.s32 0, %v291
    %v293 = vrot.slane %v288, %v292
    %v311 = vunpack.c.l.b16 %v272
    %v312 = vunpack.c.l.b16 %v273
    %v313 = vunpack.c.l.b16 %v274
    %v314 = vunpack.c.l.b16 %v275
    %v315 = vunpack.c.l.b16 %v276
    %v316 = vunpack.c.l.b16 %v277
    %v317 = vunpack.c.l.b16 %v278
    %v318 = vunpack.c.l.b16 %v279
    %v319 = vunpack.c.l.b16 %v280
    %v320 = vunpack.c.l.b16 %v281
    %v321 = vunpack.c.l.b16 %v282
    %v322 = vunpack.c.l.b16 %v283
    %v323 = vunpack.c.l.b16 %v284
    %v324 = vunpack.c.l.b16 %v285
    %v325 = vunpack.c.l.b16 %v286
    %v326 = vunpack.c.l.b16 %v287
    %v327 = vpack.c.b16 %v312, %v311
    %v328 = vpack.c.b16 %v314, %v313
    %v329 = vpack.c.b16 %v316, %v315
    %v330 = vpack.c.b16 %v318, %v317
    %v331 = vpack.c.b16 %v320, %v319
    %v332 = vpack.c.b16 %v322, %v321
    %v333 = vpack.c.b16 %v324, %v323
    %v334 = vpack.c.b16 %v326, %v325
    %343 = vmatprep.subr.bf16.mxu0 0
    %344 = vmatpush1.bf16.msra.mxu0 %v327
    %345 = vmatprep.subr.bf16.mxu0 0
    %346 = vmatpush1.bf16.msra.mxu0 %v328
    %347 = vmatprep.subr.bf16.mxu0 0
    %348 = vmatpush1.bf16.msra.mxu0 %v329
    %349 = vmatprep.subr.bf16.mxu0 0
    %350 = vmatpush1.bf16.msra.mxu0 %v330
    %351 = vmatprep.subr.bf16.mxu0 0
    %352 = vmatpush1.bf16.msra.mxu0 %v331
    %353 = vmatprep.subr.bf16.mxu0 0
    %354 = vmatpush1.bf16.msra.mxu0 %v332
    %355 = vmatprep.subr.bf16.mxu0 0
    %356 = vmatpush1.bf16.msra.mxu0 %v333
    %357 = vmatprep.subr.bf16.mxu0 0
    %358 = vmatpush1.bf16.msra.mxu0 %v334
    %359 = vmatprep.subr.bf16.mxu0 0
    %360 = vmatpush1.bf16.msra.mxu0 0
    %361 = vmatprep.subr.bf16.mxu0 0
    %362 = vmatpush1.bf16.msra.mxu0 0
    %363 = vmatprep.subr.bf16.mxu0 0
    %364 = vmatpush1.bf16.msra.mxu0 0
    %365 = vmatprep.subr.bf16.mxu0 0
    %366 = vmatpush1.bf16.msra.mxu0 0
    %367 = vmatprep.subr.bf16.mxu0 0
    %368 = vmatpush1.bf16.msra.mxu0 0
    %369 = vmatprep.subr.bf16.mxu0 0
    %370 = vmatpush1.bf16.msra.mxu0 0
    %371 = vmatprep.subr.bf16.mxu0 0
    %372 = vmatpush1.bf16.msra.mxu0 0
    %373 = vmatprep.subr.bf16.mxu0 0
    %374 = vmatpush1.bf16.msra.mxu0 0
    %375 = vmatprep.mubr.bf16.mxu0 0
    %376 = vmatmul.mubr.bf16.gmra.mrb[0].mxu0 %v271
    %v377 = vpop.f32.mrb[0].mxu0
    %v378 = vadd.f32 %v293, %v377
    %v379 = vpop.f32.mrb[0].mxu0
    %v380 = vpop.f32.mrb[0].mxu0
    %v381 = vadd.f32 %v293, %v380
    %v382 = vpop.f32.mrb[0].mxu0
    %383 = vdwg.mxu0
    %384 = vst [vmem:[#allocation10] sm:$0xff] %v378
    %385 = vst [vmem:[#allocation10 + $0x8] sm:$0xff] %v381
    // Predicated region
    $region46: #{tpu_custom_call.1} parent=1 // pred_check
      _
    $region47: #{tpu_custom_call.1} parent=1 // pred_check_branch
      %387 = sbr.rel (0) target = $region49
    $region48: #{tpu_custom_call.1} parent=1 // pred_region
      %s389 = ssub.s32 256, 256
      %390 = vsyncadd [#allocation4], %s389
      %s391 = sshll.u32 [#allocation10], 4
      %s392 = int_to_ptr.vmem [resolvable:$true] %s391
      %397 = dma.vmem_to_hbm [thread:$0]  %s392, 256, %s7, [#allocation4], 128, 128, 8
    $region49: #{tpu_custom_call.1} parent=1 // pred_fallthru
      _
    // Predicated region
    $region50: #{tpu_custom_call.1} parent=1 // pred_check
      _
    $region51: #{tpu_custom_call.1} parent=1 // pred_check_branch
      %399 = sbr.rel (0) target = $region53
    $region52: #{tpu_custom_call.1} parent=1 // pred_region
      %400 = dma.done [#allocation4], 256
    $region53: #{tpu_custom_call.1} parent=1 // pred_fallthru
      _
    %401 = vsyncpa [#allocation3], 1
    %402 = vsyncpa [#allocation6], 1
    %403 = vsyncpa [#allocation9], 1
    %404 = vsyncpa [#allocation4], 1

// kernel: tpu_custom_call.1
$region0: #{tpu_custom_call.1}
  #allocation0 [shape = 'u32[]', space=smem, size = 0x4, offset = 0x4, fixed_abs, tag = 'smem constant byte address 0x4 - core index']
  #allocation1 [shape = 'u32[144,128]{1,0:T(1,128)}', space=vmem, size = 0x12000, scoped, tag = 'internal scratch']
  #allocation2 [shape = 'f32[16,128]{1,0:T(8,128)}', space=vmem, size = 0x2000, scoped, tag = 'scratch operand']
  %s0 = inlined_call_operand.hbm [shape: bf16[16,128], index: 0, kind: input, shape index: {}]
  %s1 = inlined_call_operand.hbm [shape: bf16[128,128], index: 1, kind: input, shape index: {}]
  %s2 = inlined_call_operand.vmem [shape: f32[1,128], index: 2, kind: input, shape index: {}]
  %s3 = inlined_call_operand.hbm [shape: bf16[16,128], index: 3, kind: output, shape index: {}]
  %s4 = sld [smem:[#allocation0]]
  $region38: #{tpu_custom_call.1} parent=0
    _
  %s6 = ssub.s32 1, %s4
  %s7 = scalar_select 0, %s6, %s4
  $region1: #{tpu_custom_call.1} parent=0
    #allocation3 [shape = 'u8[4096]{0}', space=vmem, size = 0x1000, scoped, tag = 'input window, operand 0, single buffered']
    #allocation4 [shape = 's32[1]{0}', space=sflag, size = 0x4, scoped, tag = 'scoped memory for tpu_custom_call.1']
    #allocation5 [shape = 's32[1]{0}', space=sflag, size = 0x4, scoped, tag = 'scoped memory for tpu_custom_call.1']
    #allocation6 [shape = 'u8[32768]{0}', space=vmem, size = 0x8000, scoped, tag = 'input window, operand 1, single buffered']
    #allocation7 [shape = 's32[1]{0}', space=sflag, size = 0x4, scoped, tag = 'scoped memory for tpu_custom_call.1']
    #allocation8 [shape = 'u8[4096]{0}', space=vmem, size = 0x1000, scoped, tag = 'output window, operand 0, single buffered']
    %8 = vsyncpa [#allocation4], 0
    %9 = vsyncpa [#allocation7], 0
    %10 = vsyncpa [#allocation5], 0
    // Predicated region
    $region2: #{tpu_custom_call.1} parent=1 // pred_check
      _
    $region3: #{tpu_custom_call.1} parent=1 // pred_check_branch
      %12 = sbr.rel (0) target = $region5
    $region4: #{tpu_custom_call.1} parent=1 // pred_region
      %s14 = ssub.s32 128, 128
      %15 = vsyncadd [#allocation4], %s14
      %s16 = sshll.u32 [#allocation3], 4
      %s17 = int_to_ptr.vmem [resolvable:$true] %s16
      %22 = dma.hbm_to_vmem [thread:$0]  %s0, 128, %s17, [#allocation4], 64, 64, 4
    $region5: #{tpu_custom_call.1} parent=1 // pred_fallthru
      _
    // Predicated region
    $region6: #{tpu_custom_call.1} parent=1 // pred_check
      _
    $region7: #{tpu_custom_call.1} parent=1 // pred_check_branch
      %24 = sbr.rel (0) target = $region9
    $region8: #{tpu_custom_call.1} parent=1 // pred_region
      %s26 = ssub.s32 1024, 1024
      %27 = vsyncadd [#allocation7], %s26
      %s28 = sshll.u32 [#allocation6], 4
      %s29 = int_to_ptr.vmem [resolvable:$true] %s28
      %34 = dma.hbm_to_vmem [thread:$0]  %s1, 1024, %s29, [#allocation7], 64, 64, 4
    $region9: #{tpu_custom_call.1} parent=1 // pred_fallthru
      _
    // Predicated region
    $region10: #{tpu_custom_call.1} parent=1 // pred_check
      _
    $region11: #{tpu_custom_call.1} parent=1 // pred_check_branch
      %36 = sbr.rel (0) target = $region13
    $region12: #{tpu_custom_call.1} parent=1 // pred_region
      _
    $region13: #{tpu_custom_call.1} parent=1 // pred_fallthru
      _
    // Predicated region
    $region14: #{tpu_custom_call.1} parent=1 // pred_check
      _
    $region15: #{tpu_custom_call.1} parent=1 // pred_check_branch
      %38 = sbr.rel (0) target = $region17
    $region16: #{tpu_custom_call.1} parent=1 // pred_region
      %39 = dma.done [#allocation4], 128
    $region17: #{tpu_custom_call.1} parent=1 // pred_fallthru
      _
    // Predicated region
    $region18: #{tpu_custom_call.1} parent=1 // pred_check
      _
    $region19: #{tpu_custom_call.1} parent=1 // pred_check_branch
      %41 = sbr.rel (0) target = $region21
    $region20: #{tpu_custom_call.1} parent=1 // pred_region
      %42 = dma.done [#allocation7], 1024
    $region21: #{tpu_custom_call.1} parent=1 // pred_fallthru
      _
    %p44 = scmp.eq.s32.totalorder 0, 0
    // Predicated region
    $region22: #{tpu_custom_call.1} parent=1 // pred_check
      %p45 = pneg %p44
    $region23: #{tpu_custom_call.1} parent=1 // pred_check_branch
      %47 = sbr.rel (%p45) target = $region25
    $region24: #{tpu_custom_call.1} parent=1 // pred_region
      %48 = vst [vmem:[#allocation2] sm:$0xff] 0.0
      %49 = vst [vmem:[#allocation2 + $0x8] sm:$0xff] 0.0
    $region25: #{tpu_custom_call.1} parent=1 // pred_fallthru
      _
    %v50 = vld [vmem:[#allocation2] sm:$0xff]
    %v51 = vld [vmem:[#allocation2 + $0x8] sm:$0xff]
    %v52 = vld [vmem:[#allocation3] sm:$0xf]
    %v53 = vld [vmem:[#allocation3 + $0x4] sm:$0xf]
    %v54 = vld [vmem:[#allocation6] sm:$0xf]
    %v55 = vld [vmem:[#allocation6 + $0x4] sm:$0xf]
    %v56 = vld [vmem:[#allocation6 + $0x8] sm:$0xf]
    %v57 = vld [vmem:[#allocation6 + $0xc] sm:$0xf]
    %v58 = vld [vmem:[#allocation6 + $0x10] sm:$0xf]
    %v59 = vld [vmem:[#allocation6 + $0x14] sm:$0xf]
    %v60 = vld [vmem:[#allocation6 + $0x18] sm:$0xf]
    %v61 = vld [vmem:[#allocation6 + $0x1c] sm:$0xf]
    %v62 = vld [vmem:[#allocation6 + $0x20] sm:$0xf]
    %v63 = vld [vmem:[#allocation6 + $0x24] sm:$0xf]
    %v64 = vld [vmem:[#allocation6 + $0x28] sm:$0xf]
    %v65 = vld [vmem:[#allocation6 + $0x2c] sm:$0xf]
    %v66 = vld [vmem:[#allocation6 + $0x30] sm:$0xf]
    %v67 = vld [vmem:[#allocation6 + $0x34] sm:$0xf]
    %v68 = vld [vmem:[#allocation6 + $0x38] sm:$0xf]
    %v69 = vld [vmem:[#allocation6 + $0x3c] sm:$0xf]
    %v72 = vunpack.c.l.b16 %v52
    %v73 = vunpack.c.l.b16 %v53
    %v74 = vpack.c.b16 %v73, %v72
    %v92 = vunpack.c.l.b16 %v54
    %v93 = vunpack.c.l.b16 %v55
    %v94 = vunpack.c.l.b16 %v56
    %v95 = vunpack.c.l.b16 %v57
    %v96 = vunpack.c.l.b16 %v58
    %v97 = vunpack.c.l.b16 %v59
    %v98 = vunpack.c.l.b16 %v60
    %v99 = vunpack.c.l.b16 %v61
    %v100 = vunpack.c.l.b16 %v62
    %v101 = vunpack.c.l.b16 %v63
    %v102 = vunpack.c.l.b16 %v64
    %v103 = vunpack.c.l.b16 %v65
    %v104 = vunpack.c.l.b16 %v66
    %v105 = vunpack.c.l.b16 %v67
    %v106 = vunpack.c.l.b16 %v68
    %v107 = vunpack.c.l.b16 %v69
    %v108 = vpack.c.b16 %v93, %v92
    %v109 = vpack.c.b16 %v95, %v94
    %v110 = vpack.c.b16 %v97, %v96
    %v111 = vpack.c.b16 %v99, %v98
    %v112 = vpack.c.b16 %v101, %v100
    %v113 = vpack.c.b16 %v103, %v102
    %v114 = vpack.c.b16 %v105, %v104
    %v115 = vpack.c.b16 %v107, %v106
    %124 = vmatprep.subr.bf16.mxu0 0
    %125 = vmatpush1.bf16.msra.mxu0 %v108
    %126 = vmatprep.subr.bf16.mxu0 0
    %127 = vmatpush1.bf16.msra.mxu0 %v109
    %128 = vmatprep.subr.bf16.mxu0 0
    %129 = vmatpush1.bf16.msra.mxu0 %v110
    %130 = vmatprep.subr.bf16.mxu0 0
    %131 = vmatpush1.bf16.msra.mxu0 %v111
    %132 = vmatprep.subr.bf16.mxu0 0
    %133 = vmatpush1.bf16.msra.mxu0 %v112
    %134 = vmatprep.subr.bf16.mxu0 0
    %135 = vmatpush1.bf16.msra.mxu0 %v113
    %136 = vmatprep.subr.bf16.mxu0 0
    %137 = vmatpush1.bf16.msra.mxu0 %v114
    %138 = vmatprep.subr.bf16.mxu0 0
    %139 = vmatpush1.bf16.msra.mxu0 %v115
    %140 = vmatprep.subr.bf16.mxu0 0
    %141 = vmatpush1.bf16.msra.mxu0 0
    %142 = vmatprep.subr.bf16.mxu0 0
    %143 = vmatpush1.bf16.msra.mxu0 0
    %144 = vmatprep.subr.bf16.mxu0 0
    %145 = vmatpush1.bf16.msra.mxu0 0
    %146 = vmatprep.subr.bf16.mxu0 0
    %147 = vmatpush1.bf16.msra.mxu0 0
    %148 = vmatprep.subr.bf16.mxu0 0
    %149 = vmatpush1.bf16.msra.mxu0 0
    %150 = vmatprep.subr.bf16.mxu0 0
    %151 = vmatpush1.bf16.msra.mxu0 0
    %152 = vmatprep.subr.bf16.mxu0 0
    %153 = vmatpush1.bf16.msra.mxu0 0
    %154 = vmatprep.subr.bf16.mxu0 0
    %155 = vmatpush1.bf16.msra.mxu0 0
    %156 = vmatprep.mubr.bf16.mxu0 0
    %157 = vmatmul.mubr.bf16.gmra.mrb[0].mxu0 %v74
    %v158 = vpop.f32.mrb[0].mxu0
    %v159 = vadd.f32 0.0, %v158
    %v160 = vpop.f32.mrb[0].mxu0
    %v161 = vpop.f32.mrb[0].mxu0
    %v162 = vadd.f32 0.0, %v161
    %v163 = vpop.f32.mrb[0].mxu0
    %164 = vdwg.mxu0
    %v165 = vadd.f32 %v50, %v159
    %v166 = vadd.f32 %v51, %v162
    %167 = vst [vmem:[#allocation2] sm:$0xff] %v165
    %168 = vst [vmem:[#allocation2 + $0x8] sm:$0xff] %v166
    // Predicated region
    $region26: #{tpu_custom_call.1} parent=1 // pred_check
      %p169 = pneg %p44
    $region27: #{tpu_custom_call.1} parent=1 // pred_check_branch
      %171 = sbr.rel (%p169) target = $region29
    $region28: #{tpu_custom_call.1} parent=1 // pred_region
      %v172 = vld [vmem:[#allocation2] sm:$0xff]
      %v173 = vld [vmem:[#allocation2 + $0x8] sm:$0xff]
      %v174 = vld [vmem:[%s2] sm:$0x1]
      %v176 = vlaneseq
      %v177 = vshrl.u32 %v176, 7
      %v178 = vsub.s32 0, %v177
      %v179 = vrot.slane %v174, %v178
      %v181 = vadd.f32 %v172, %v179
      %v182 = vadd.f32 %v173, %v179
      %v183 = vmax.f32 %v181, 0.0
      %v184 = vmax.f32 %v182, 0.0
      %v185 = vpack.c.bf16 %v184, %v183
      %v187 = vunpack.c.l.b16 %v185
      %v188 = vunpack.c.h.b16 %v185
      %v189 = vpack.c.b16 %v187, %v187
      %v190 = vpack.c.b16 %v188, %v188
      %193 = vst [vmem:[#allocation8] sm:$0xf] %v189
      %194 = vst [vmem:[#allocation8 + $0x4] sm:$0xf] %v190
    $region29: #{tpu_custom_call.1} parent=1 // pred_fallthru
      _
    // Predicated region
    $region30: #{tpu_custom_call.1} parent=1 // pred_check
      _
    $region31: #{tpu_custom_call.1} parent=1 // pred_check_branch
      %196 = sbr.rel (0) target = $region33
    $region32: #{tpu_custom_call.1} parent=1 // pred_region
      %s198 = ssub.s32 128, 128
      %199 = vsyncadd [#allocation5], %s198
      %s200 = sshll.u32 [#allocation8], 4
      %s201 = int_to_ptr.vmem [resolvable:$true] %s200
      %206 = dma.vmem_to_hbm [thread:$0]  %s201, 128, %s3, [#allocation5], 64, 64, 4
    $region33: #{tpu_custom_call.1} parent=1 // pred_fallthru
      _
    // Predicated region
    $region34: #{tpu_custom_call.1} parent=1 // pred_check
      _
    $region35: #{tpu_custom_call.1} parent=1 // pred_check_branch
      %208 = sbr.rel (0) target = $region37
    $region36: #{tpu_custom_call.1} parent=1 // pred_region
      %209 = dma.done [#allocation5], 128
    $region37: #{tpu_custom_call.1} parent=1 // pred_fallthru
      _
    %210 = vsyncpa [#allocation4], 1
    %211 = vsyncpa [#allocation7], 1
    %212 = vsyncpa [#allocation5], 1

</llo_original>
